<compile_context>
chip_gen: v5e
topology: v5e:2x2
jax: 0.10.0
libtpu: 0.0.40
codegen_flags: <defaults>
</compile_context>

<pallas_src>
import functools

import jax
import jax.numpy as jnp
from jax import lax
from jax.experimental import pallas as pl
from jax.experimental.pallas import tpu as pltpu

# d2l chapter 4.6 dropout rates (module reads module-level globals dropout1/2)
DROPOUT1 = 0.2
DROPOUT2 = 0.5


def _round_up(x, m):
    return (x + m - 1) // m * m


def _hash_bits(shape, base_u32):
    """Counter-based uint32 random bits (murmur3-fmix style mixing).

    Pure VPU integer ops (iota / mul / xor / logical shifts), so it lowers both
    under Mosaic on TPU and in interpret mode -- no TPU-only PRNG primitives.
    """
    r = lax.broadcasted_iota(jnp.int32, shape, 0).astype(jnp.uint32)
    c = lax.broadcasted_iota(jnp.int32, shape, 1).astype(jnp.uint32)
    x = base_u32 ^ (r * jnp.uint32(0x9E3779B1)) ^ (c * jnp.uint32(0x85EBCA77))
    x = x ^ jnp.right_shift(x, jnp.uint32(16))
    x = x * jnp.uint32(0x7FEB352D)
    x = x ^ jnp.right_shift(x, jnp.uint32(15))
    x = x * jnp.uint32(0x846CA68B)
    x = x ^ jnp.right_shift(x, jnp.uint32(16))
    return x


def _dropout_keep(h, rate, seed_ref, salt):
    """Zero elements with probability `rate` (integer threshold compare).

    The 1/(1-rate) keep-scale is folded into the *next* layer's weights in the
    wrapper, so no per-element rescale multiply is needed here.
    """
    if rate <= 0.0:
        return h
    if rate >= 1.0:
        return jnp.zeros_like(h)
    seed_u = seed_ref[0].astype(jnp.uint32)            # nonnegative by construction
    pid_u = pl.program_id(0).astype(jnp.uint32)        # per batch tile
    base = (seed_u * jnp.uint32(0x27D4EB2F)
            + pid_u * jnp.uint32(0x165667B1)
            + jnp.uint32(salt) * jnp.uint32(0xC2B2AE3D))
    bits = _hash_bits(h.shape, base)
    thresh = jnp.uint32(int(rate * (2 ** 32)))
    return jnp.where(bits >= thresh, h, jnp.zeros_like(h))


def mlp_dropout_kernel(seed_ref, x_ref, w1_ref, b1_ref, w2_ref, b2_ref,
                       w3_ref, b3_ref, o_ref, *, training):
    # x / weights arrive as bf16; all matmuls accumulate in f32 on the MXU.
    # Elementwise work (ReLU / dropout select) stays in f32 (v5e VPU is f32-only);
    # activations are cast to bf16 only right before the next dot.
    x = x_ref[...]

    h1 = jnp.dot(x, w1_ref[...], preferred_element_type=jnp.float32) + b1_ref[...]
    h1 = jnp.maximum(h1, 0.0)
    if training:
        h1 = _dropout_keep(h1, DROPOUT1, seed_ref, salt=1)

    h2 = jnp.dot(h1.astype(w2_ref.dtype), w2_ref[...],
                 preferred_element_type=jnp.float32) + b2_ref[...]
    h2 = jnp.maximum(h2, 0.0)
    if training:
        h2 = _dropout_keep(h2, DROPOUT2, seed_ref, salt=2)

    out = jnp.dot(h2.astype(w3_ref.dtype), w3_ref[...],
                  preferred_element_type=jnp.float32) + b3_ref[...]
    o_ref[...] = out.astype(o_ref.dtype)


def net_forward(x, params, *, num_inputs, seed=0, training=True, block_m=512):
    """Forward pass of Net. x: (B, C, H, W) or anything reshapeable to (-1, num_inputs)."""
    w1, b1, w2, b2, w3, b3 = params
    x2d = x.reshape((-1, num_inputs))
    B = x2d.shape[0]
    h1_dim = w1.shape[1]
    h2_dim = w2.shape[1]
    num_outputs = w3.shape[1]
    out_pad = _round_up(max(num_outputs, 128), 128)   # lane-dense output slab

    # bf16 activations/weights halve the dominant HBM stream; accumulation is f32.
    x_bf = x2d.astype(jnp.bfloat16)
    w1_bf = w1.astype(jnp.bfloat16)

    # Fold dropout keep-scales into the following layer's weights (training only):
    #   (mask1*h1/(1-p1)) @ w2 == (mask1*h1) @ (w2/(1-p1)),   likewise for w3.
    w2_eff = w2 * jnp.float32(1.0 / (1.0 - DROPOUT1)) if training else w2
    w3_eff = w3 * jnp.float32(1.0 / (1.0 - DROPOUT2)) if training else w3
    w2_bf = w2_eff.astype(jnp.bfloat16)

    # Zero-pad fc3 weight/bias to a multiple of 128 lanes (unmasked vst stores).
    w3_p = jnp.zeros((h2_dim, out_pad), jnp.float32).at[:, :num_outputs].set(w3_eff)
    b3_p = jnp.zeros((1, out_pad), jnp.float32).at[:, :num_outputs].set(
        b3.reshape(1, num_outputs))
    w3_bf = w3_p.astype(jnp.bfloat16)

    b1_f = b1.reshape(1, h1_dim).astype(jnp.float32)
    b2_f = b2.reshape(1, h2_dim).astype(jnp.float32)

    # Batch tile: full batch if small, else block_m rows per grid step
    # (512 keeps the per-step footprint ~3 MiB: fine on v5e/v6e/v7x defaults).
    bm = min(block_m, B)
    grid = (pl.cdiv(B, bm),)

    seed_arr = jnp.array([abs(int(seed))], dtype=jnp.int32)  # keep nonnegative

    kernel = functools.partial(mlp_dropout_kernel, training=training)

    flops = 2 * B * (num_inputs * h1_dim + h1_dim * h2_dim + h2_dim * out_pad)
    bytes_accessed = (B * num_inputs * 2
                      + (num_inputs * h1_dim + h1_dim * h2_dim + h2_dim * out_pad) * 2
                      + (h1_dim + h2_dim + out_pad) * 4
                      + B * out_pad * 4)

    grid_spec = pltpu.PrefetchScalarGridSpec(
        num_scalar_prefetch=1,                 # seed -> SMEM
        grid=grid,
        in_specs=[
            pl.BlockSpec((bm, num_inputs), lambda i, s: (i, 0)),     # x: tiled over batch
            pl.BlockSpec((num_inputs, h1_dim), lambda i, s: (0, 0)),  # w1: VMEM-resident
            pl.BlockSpec((1, h1_dim), lambda i, s: (0, 0)),           # b1
            pl.BlockSpec((h1_dim, h2_dim), lambda i, s: (0, 0)),      # w2
            pl.BlockSpec((1, h2_dim), lambda i, s: (0, 0)),           # b2
            pl.BlockSpec((h2_dim, out_pad), lambda i, s: (0, 0)),     # w3 (padded)
            pl.BlockSpec((1, out_pad), lambda i, s: (0, 0)),          # b3 (padded)
        ],
        out_specs=pl.BlockSpec((bm, out_pad), lambda i, s: (i, 0)),
    )

    out_padded = pl.pallas_call(
        kernel,
        out_shape=jax.ShapeDtypeStruct((B, out_pad), jnp.float32),
        grid_spec=grid_spec,
        compiler_params=pltpu.CompilerParams(
            dimension_semantics=("parallel",)),   # shards batch tiles across v7x TCs
        cost_estimate=pl.CostEstimate(flops=flops, transcendentals=0,
                                      bytes_accessed=bytes_accessed),
    )(seed_arr, x_bf, w1_bf, b1_f, w2_bf, b2_f, w3_bf, b3_p)

    return out_padded[:, :num_outputs]


def init_params(key, num_inputs, num_outputs, num_hiddens1, num_hiddens2):
    """Deterministic Linear-layer init (uniform +-1/sqrt(fan_in), like nn.Linear)."""
    ks = jax.random.split(key, 6)

    def lin(kw, kb, fan_in, fan_out):
        bound = 1.0 / jnp.sqrt(float(fan_in))
        # stored already transposed to (in, out) for x @ W
        w = jax.random.uniform(kw, (fan_in, fan_out), jnp.float32, -bound, bound)
        b = jax.random.uniform(kb, (1, fan_out), jnp.float32, -bound, bound)
        return w, b

    w1, b1 = lin(ks[0], ks[1], num_inputs, num_hiddens1)
    w2, b2 = lin(ks[2], ks[3], num_hiddens1, num_hiddens2)
    w3, b3 = lin(ks[4], ks[5], num_hiddens2, num_outputs)
    return (w1, b1, w2, b2, w3, b3)


if __name__ == "__main__":
    # Small d2l-ch4.6-style shapes: Fashion-MNIST-like NCHW input.
    B, C, H, W = 32, 1, 28, 28
    num_inputs = C * H * W          # 784
    num_hiddens1 = 256
    num_hiddens2 = 256
    num_outputs = 10

    key = jax.random.PRNGKey(0)
    kx, kp = jax.random.split(key)
    x = jax.random.normal(kx, (B, C, H, W), dtype=jnp.float32)
    params = init_params(kp, num_inputs, num_outputs, num_hiddens1, num_hiddens2)

    # small block_m so the batch grid (>1 step) is actually exercised
    out = net_forward(x, params, num_inputs=num_inputs, seed=0,
                      training=True, block_m=16)
    out = jax.block_until_ready(out)
    assert out.shape == (B, num_outputs), out.shape
    assert bool(jnp.all(jnp.isfinite(out)))

    # Sanity: eval path (training=False) vs plain-JAX reference with the same bf16 casts.
    out_eval = jax.block_until_ready(
        net_forward(x, params, num_inputs=num_inputs, training=False, block_m=16))
    w1, b1, w2, b2, w3, b3 = params
    x2d = x.reshape((-1, num_inputs)).astype(jnp.bfloat16)
    ref = jnp.maximum(jnp.dot(x2d, w1.astype(jnp.bfloat16),
                              preferred_element_type=jnp.float32) + b1, 0.0)
    ref = jnp.maximum(jnp.dot(ref.astype(jnp.bfloat16), w2.astype(jnp.bfloat16),
                              preferred_element_type=jnp.float32) + b2, 0.0)
    ref = jnp.dot(ref.astype(jnp.bfloat16), w3.astype(jnp.bfloat16),
                  preferred_element_type=jnp.float32) + b3
    assert bool(jnp.allclose(out_eval, ref, atol=1e-2, rtol=1e-2)), (
        float(jnp.max(jnp.abs(out_eval - ref))))

    print("KERNEL_OK")
</pallas_src>

<mosaic_0001>
module attributes {stable_mosaic.version = 11 : i64} {
  func.func @mlp_dropout_kernel(%arg0: i32, %arg1: memref<1xi32, #tpu.memory_space<smem>>, %arg2: memref<16x784xbf16, #tpu.memory_space<vmem>>, %arg3: memref<784x256xbf16, #tpu.memory_space<vmem>>, %arg4: memref<1x256xf32, #tpu.memory_space<vmem>>, %arg5: memref<256x256xbf16, #tpu.memory_space<vmem>>, %arg6: memref<1x256xf32, #tpu.memory_space<vmem>>, %arg7: memref<256x128xbf16, #tpu.memory_space<vmem>>, %arg8: memref<1x128xf32, #tpu.memory_space<vmem>>, %arg9: memref<16x128xf32, #tpu.memory_space<vmem>>) attributes {dimension_semantics = [#tpu.dimension_semantics<parallel>], iteration_bounds = array<i64: 2>, scalar_prefetch = 1 : i64, scratch_operands = 0 : i64, tpu.core_type = #tpu.core_type<tc>, window_params = [{transform_indices = @transform_0, window_bounds = array<i64: 16, 784>}, {pipeline_mode = #tpu.pipeline_mode<synchronous>, transform_indices = @transform_1, window_bounds = array<i64: 784, 256>}, {pipeline_mode = #tpu.pipeline_mode<synchronous>, transform_indices = @transform_2, window_bounds = array<i64: 1, 256>}, {pipeline_mode = #tpu.pipeline_mode<synchronous>, transform_indices = @transform_3, window_bounds = array<i64: 256, 256>}, {pipeline_mode = #tpu.pipeline_mode<synchronous>, transform_indices = @transform_4, window_bounds = array<i64: 1, 256>}, {pipeline_mode = #tpu.pipeline_mode<synchronous>, transform_indices = @transform_5, window_bounds = array<i64: 256, 128>}, {pipeline_mode = #tpu.pipeline_mode<synchronous>, transform_indices = @transform_6, window_bounds = array<i64: 1, 128>}, {transform_indices = @transform_7, window_bounds = array<i64: 16, 128>}]} {
    %c0 = arith.constant 0 : index
    %c0_0 = arith.constant 0 : index
    %0 = vector.load %arg2[%c0, %c0_0] : memref<16x784xbf16, #tpu.memory_space<vmem>>, vector<16x784xbf16>
    %c0_1 = arith.constant 0 : index
    %c0_2 = arith.constant 0 : index
    %1 = vector.load %arg3[%c0_1, %c0_2] : memref<784x256xbf16, #tpu.memory_space<vmem>>, vector<784x256xbf16>
    %cst = arith.constant dense<0.000000e+00> : vector<16x256xf32>
    %2 = tpu.matmul %0, %1, %cst {dimension_numbers = #tpu.dot_dimension_numbers<[1], [0], [0], [1], [0, 0, 1, 1], [], []>} : vector<16x784xbf16>, vector<784x256xbf16>, vector<16x256xf32> -> vector<16x256xf32>
    %c0_3 = arith.constant 0 : index
    %c0_4 = arith.constant 0 : index
    %3 = vector.load %arg4[%c0_3, %c0_4] : memref<1x256xf32, #tpu.memory_space<vmem>>, vector<1x256xf32>
    %4 = vector.broadcast %3 : vector<1x256xf32> to vector<16x256xf32>
    %5 = arith.addf %2, %4 : vector<16x256xf32>
    %cst_5 = arith.constant 0.000000e+00 : f32
    %6 = vector.broadcast %cst_5 : f32 to vector<16x256xf32>
    %7 = arith.maximumf %5, %6 : vector<16x256xf32>
    %c0_6 = arith.constant 0 : index
    %8 = memref.load %arg1[%c0_6] : memref<1xi32, #tpu.memory_space<smem>>
    %c668265263_i32 = arith.constant 668265263 : i32
    %9 = arith.muli %8, %c668265263_i32 : i32
    %c374761393_i32 = arith.constant 374761393 : i32
    %10 = arith.muli %arg0, %c374761393_i32 : i32
    %11 = arith.addi %9, %10 : i32
    %c1_i32 = arith.constant 1 : i32
    %c-1028477379_i32 = arith.constant -1028477379 : i32
    %12 = arith.muli %c1_i32, %c-1028477379_i32 : i32
    %13 = arith.addi %11, %12 : i32
    %14 = tpu.iota {dimensions = array<i32: 0>} : vector<16x256xi32>
    %15 = tpu.iota {dimensions = array<i32: 1>} : vector<16x256xi32>
    %c-1640531535_i32 = arith.constant -1640531535 : i32
    %16 = vector.broadcast %c-1640531535_i32 : i32 to vector<16x256xi32>
    %17 = arith.muli %14, %16 : vector<16x256xi32>
    %18 = vector.broadcast %13 : i32 to vector<16x256xi32>
    %19 = arith.xori %18, %17 : vector<16x256xi32>
    %c-2048144777_i32 = arith.constant -2048144777 : i32
    %20 = vector.broadcast %c-2048144777_i32 : i32 to vector<16x256xi32>
    %21 = arith.muli %15, %20 : vector<16x256xi32>
    %22 = arith.xori %19, %21 : vector<16x256xi32>
    %c16_i32 = arith.constant 16 : i32
    %23 = vector.broadcast %c16_i32 : i32 to vector<16x256xi32>
    %24 = arith.shrui %22, %23 : vector<16x256xi32>
    %25 = arith.xori %22, %24 : vector<16x256xi32>
    %c2146121005_i32 = arith.constant 2146121005 : i32
    %26 = vector.broadcast %c2146121005_i32 : i32 to vector<16x256xi32>
    %27 = arith.muli %25, %26 : vector<16x256xi32>
    %c15_i32 = arith.constant 15 : i32
    %28 = vector.broadcast %c15_i32 : i32 to vector<16x256xi32>
    %29 = arith.shrui %27, %28 : vector<16x256xi32>
    %30 = arith.xori %27, %29 : vector<16x256xi32>
    %c-2073254261_i32 = arith.constant -2073254261 : i32
    %31 = vector.broadcast %c-2073254261_i32 : i32 to vector<16x256xi32>
    %32 = arith.muli %30, %31 : vector<16x256xi32>
    %c16_i32_7 = arith.constant 16 : i32
    %33 = vector.broadcast %c16_i32_7 : i32 to vector<16x256xi32>
    %34 = arith.shrui %32, %33 : vector<16x256xi32>
    %35 = arith.xori %32, %34 : vector<16x256xi32>
    %c858993459_i32 = arith.constant 858993459 : i32
    %36 = vector.broadcast %c858993459_i32 : i32 to vector<16x256xi32>
    %37 = arith.cmpi uge, %35, %36 : vector<16x256xi32>
    %cst_8 = arith.constant 0.000000e+00 : f32
    %38 = vector.broadcast %cst_8 : f32 to vector<16x256xf32>
    %39 = arith.select %37, %7, %38 : vector<16x256xi1>, vector<16x256xf32>
    %40 = arith.truncf %39 : vector<16x256xf32> to vector<16x256xbf16>
    %c0_9 = arith.constant 0 : index
    %c0_10 = arith.constant 0 : index
    %41 = vector.load %arg5[%c0_9, %c0_10] : memref<256x256xbf16, #tpu.memory_space<vmem>>, vector<256x256xbf16>
    %cst_11 = arith.constant dense<0.000000e+00> : vector<16x256xf32>
    %42 = tpu.matmul %40, %41, %cst_11 {dimension_numbers = #tpu.dot_dimension_numbers<[1], [0], [0], [1], [0, 0, 1, 1], [], []>} : vector<16x256xbf16>, vector<256x256xbf16>, vector<16x256xf32> -> vector<16x256xf32>
    %c0_12 = arith.constant 0 : index
    %c0_13 = arith.constant 0 : index
    %43 = vector.load %arg6[%c0_12, %c0_13] : memref<1x256xf32, #tpu.memory_space<vmem>>, vector<1x256xf32>
    %44 = vector.broadcast %43 : vector<1x256xf32> to vector<16x256xf32>
    %45 = arith.addf %42, %44 : vector<16x256xf32>
    %cst_14 = arith.constant 0.000000e+00 : f32
    %46 = vector.broadcast %cst_14 : f32 to vector<16x256xf32>
    %47 = arith.maximumf %45, %46 : vector<16x256xf32>
    %c0_15 = arith.constant 0 : index
    %48 = memref.load %arg1[%c0_15] : memref<1xi32, #tpu.memory_space<smem>>
    %c668265263_i32_16 = arith.constant 668265263 : i32
    %49 = arith.muli %48, %c668265263_i32_16 : i32
    %c374761393_i32_17 = arith.constant 374761393 : i32
    %50 = arith.muli %arg0, %c374761393_i32_17 : i32
    %51 = arith.addi %49, %50 : i32
    %c2_i32 = arith.constant 2 : i32
    %c-1028477379_i32_18 = arith.constant -1028477379 : i32
    %52 = arith.muli %c2_i32, %c-1028477379_i32_18 : i32
    %53 = arith.addi %51, %52 : i32
    %54 = tpu.iota {dimensions = array<i32: 0>} : vector<16x256xi32>
    %55 = tpu.iota {dimensions = array<i32: 1>} : vector<16x256xi32>
    %c-1640531535_i32_19 = arith.constant -1640531535 : i32
    %56 = vector.broadcast %c-1640531535_i32_19 : i32 to vector<16x256xi32>
    %57 = arith.muli %54, %56 : vector<16x256xi32>
    %58 = vector.broadcast %53 : i32 to vector<16x256xi32>
    %59 = arith.xori %58, %57 : vector<16x256xi32>
    %c-2048144777_i32_20 = arith.constant -2048144777 : i32
    %60 = vector.broadcast %c-2048144777_i32_20 : i32 to vector<16x256xi32>
    %61 = arith.muli %55, %60 : vector<16x256xi32>
    %62 = arith.xori %59, %61 : vector<16x256xi32>
    %c16_i32_21 = arith.constant 16 : i32
    %63 = vector.broadcast %c16_i32_21 : i32 to vector<16x256xi32>
    %64 = arith.shrui %62, %63 : vector<16x256xi32>
    %65 = arith.xori %62, %64 : vector<16x256xi32>
    %c2146121005_i32_22 = arith.constant 2146121005 : i32
    %66 = vector.broadcast %c2146121005_i32_22 : i32 to vector<16x256xi32>
    %67 = arith.muli %65, %66 : vector<16x256xi32>
    %c15_i32_23 = arith.constant 15 : i32
    %68 = vector.broadcast %c15_i32_23 : i32 to vector<16x256xi32>
    %69 = arith.shrui %67, %68 : vector<16x256xi32>
    %70 = arith.xori %67, %69 : vector<16x256xi32>
    %c-2073254261_i32_24 = arith.constant -2073254261 : i32
    %71 = vector.broadcast %c-2073254261_i32_24 : i32 to vector<16x256xi32>
    %72 = arith.muli %70, %71 : vector<16x256xi32>
    %c16_i32_25 = arith.constant 16 : i32
    %73 = vector.broadcast %c16_i32_25 : i32 to vector<16x256xi32>
    %74 = arith.shrui %72, %73 : vector<16x256xi32>
    %75 = arith.xori %72, %74 : vector<16x256xi32>
    %c-2147483648_i32 = arith.constant -2147483648 : i32
    %76 = vector.broadcast %c-2147483648_i32 : i32 to vector<16x256xi32>
    %77 = arith.cmpi uge, %75, %76 : vector<16x256xi32>
    %cst_26 = arith.constant 0.000000e+00 : f32
    %78 = vector.broadcast %cst_26 : f32 to vector<16x256xf32>
    %79 = arith.select %77, %47, %78 : vector<16x256xi1>, vector<16x256xf32>
    %80 = arith.truncf %79 : vector<16x256xf32> to vector<16x256xbf16>
    %c0_27 = arith.constant 0 : index
    %c0_28 = arith.constant 0 : index
    %81 = vector.load %arg7[%c0_27, %c0_28] : memref<256x128xbf16, #tpu.memory_space<vmem>>, vector<256x128xbf16>
    %cst_29 = arith.constant dense<0.000000e+00> : vector<16x128xf32>
    %82 = tpu.matmul %80, %81, %cst_29 {dimension_numbers = #tpu.dot_dimension_numbers<[1], [0], [0], [1], [0, 0, 1, 1], [], []>} : vector<16x256xbf16>, vector<256x128xbf16>, vector<16x128xf32> -> vector<16x128xf32>
    %c0_30 = arith.constant 0 : index
    %c0_31 = arith.constant 0 : index
    %83 = vector.load %arg8[%c0_30, %c0_31] : memref<1x128xf32, #tpu.memory_space<vmem>>, vector<1x128xf32>
    %84 = vector.broadcast %83 : vector<1x128xf32> to vector<16x128xf32>
    %85 = arith.addf %82, %84 : vector<16x128xf32>
    %c0_32 = arith.constant 0 : index
    %c0_33 = arith.constant 0 : index
    %86 = vector.load %arg9[%c0_32, %c0_33] : memref<16x128xf32, #tpu.memory_space<vmem>>, vector<16x128xf32>
    tpu.vector_store %arg9[%c0_32, %c0_33], %85 {strides = array<i32>} : memref<16x128xf32, #tpu.memory_space<vmem>>, vector<16x128xf32>,
    return
  }
  func.func @transform_0(%arg0: i32, %arg1: memref<1xi32, #tpu.memory_space<smem>>) -> (i32, i32) {
    %c0_i32 = arith.constant 0 : i32
    %c0_i32_0 = arith.constant 0 : i32
    return %arg0, %c0_i32 : i32, i32
  }
  func.func @transform_1(%arg0: i32, %arg1: memref<1xi32, #tpu.memory_space<smem>>) -> (i32, i32) {
    %c0_i32 = arith.constant 0 : i32
    %c0_i32_0 = arith.constant 0 : i32
    %c0_i32_1 = arith.constant 0 : i32
    return %c0_i32, %c0_i32_0 : i32, i32
  }
  func.func @transform_2(%arg0: i32, %arg1: memref<1xi32, #tpu.memory_space<smem>>) -> (i32, i32) {
    %c0_i32 = arith.constant 0 : i32
    %c0_i32_0 = arith.constant 0 : i32
    %c0_i32_1 = arith.constant 0 : i32
    return %c0_i32, %c0_i32_0 : i32, i32
  }
  func.func @transform_3(%arg0: i32, %arg1: memref<1xi32, #tpu.memory_space<smem>>) -> (i32, i32) {
    %c0_i32 = arith.constant 0 : i32
    %c0_i32_0 = arith.constant 0 : i32
    %c0_i32_1 = arith.constant 0 : i32
    return %c0_i32, %c0_i32_0 : i32, i32
  }
  func.func @transform_4(%arg0: i32, %arg1: memref<1xi32, #tpu.memory_space<smem>>) -> (i32, i32) {
    %c0_i32 = arith.constant 0 : i32
    %c0_i32_0 = arith.constant 0 : i32
    %c0_i32_1 = arith.constant 0 : i32
    return %c0_i32, %c0_i32_0 : i32, i32
  }
  func.func @transform_5(%arg0: i32, %arg1: memref<1xi32, #tpu.memory_space<smem>>) -> (i32, i32) {
    %c0_i32 = arith.constant 0 : i32
    %c0_i32_0 = arith.constant 0 : i32
    %c0_i32_1 = arith.constant 0 : i32
    return %c0_i32, %c0_i32_0 : i32, i32
  }
  func.func @transform_6(%arg0: i32, %arg1: memref<1xi32, #tpu.memory_space<smem>>) -> (i32, i32) {
    %c0_i32 = arith.constant 0 : i32
    %c0_i32_0 = arith.constant 0 : i32
    %c0_i32_1 = arith.constant 0 : i32
    return %c0_i32, %c0_i32_0 : i32, i32
  }
  func.func @transform_7(%arg0: i32, %arg1: memref<1xi32, #tpu.memory_space<smem>>) -> (i32, i32) {
    %c0_i32 = arith.constant 0 : i32
    %c0_i32_0 = arith.constant 0 : i32
    return %arg0, %c0_i32 : i32, i32
  }
}

</mosaic_0001>

<llo_original>
// kernel: tpu_custom_call.1
$region0: #{tpu_custom_call.1}
  #allocation0 [shape = 'u32[]', space=smem, size = 0x4, offset = 0x4, fixed_abs, tag = 'smem constant byte address 0x4 - core index']
  #allocation1 [shape = 'u32[72,128]{1,0:T(1,128)}', space=vmem, size = 0x9000, scoped, tag = 'internal scratch']
  #allocation2 [shape = 's32[1]{0}', space=sflag, size = 0x4, scoped, tag = 'scoped memory for tpu_custom_call.1']
  #allocation3 [shape = 's32[1]{0:T(128)S(6)}', space=smem, size = 0x200, scoped, tag = 'prefetched SMEM operand 0']
  %s0 = inlined_call_operand.<no memory space> [shape: s32[1], index: 0, kind: input, shape index: {}]
  %s1 = inlined_call_operand.hbm [shape: bf16[32,784], index: 1, kind: input, shape index: {}]
  %s2 = inlined_call_operand.hbm [shape: bf16[784,256], index: 2, kind: input, shape index: {}]
  %s3 = inlined_call_operand.vmem [shape: f32[1,256], index: 3, kind: input, shape index: {}]
  %s4 = inlined_call_operand.hbm [shape: bf16[256,256], index: 4, kind: input, shape index: {}]
  %s5 = inlined_call_operand.vmem [shape: f32[1,256], index: 5, kind: input, shape index: {}]
  %s6 = inlined_call_operand.hbm [shape: bf16[256,128], index: 6, kind: input, shape index: {}]
  %s7 = inlined_call_operand.vmem [shape: f32[1,128], index: 7, kind: input, shape index: {}]
  %s8 = inlined_call_operand.hbm [shape: f32[32,128], index: 8, kind: output, shape index: {}]
  %s9 = sld [smem:[#allocation0]]
  $region77: #{tpu_custom_call.1} parent=0
    _
  %s11 = ssub.s32 1, %s9
  %s12 = scalar_select 0, %s11, %s9
  %13 = sst [smem:[#allocation3]] %s0
  $region1: #{tpu_custom_call.1} parent=0
    #allocation4 [shape = 'u8[57344]{0}', space=vmem, size = 0xe000, scoped, tag = 'input window, operand 1']
    #allocation5 [shape = 's32[2]{0}', space=sflag, size = 0x8, scoped, tag = 'scoped memory for tpu_custom_call.1']
    #allocation6 [shape = 's32[2]{0}', space=sflag, size = 0x8, scoped, tag = 'scoped memory for tpu_custom_call.1']
    #allocation7 [shape = 'u8[401408]{0}', space=vmem, size = 0x62000, scoped, tag = 'input window, operand 2, single buffered']
    #allocation8 [shape = 's32[1]{0}', space=sflag, size = 0x4, scoped, tag = 'scoped memory for tpu_custom_call.1']
    #allocation9 [shape = 'u8[131072]{0}', space=vmem, size = 0x20000, scoped, tag = 'input window, operand 4, single buffered']
    #allocation10 [shape = 'u8[65536]{0}', space=vmem, size = 0x10000, scoped, tag = 'input window, operand 6, single buffered']
    #allocation11 [shape = 's32[1]{0}', space=sflag, size = 0x4, scoped, tag = 'scoped memory for tpu_custom_call.1']
    #allocation12 [shape = 'u8[16384]{0}', space=vmem, size = 0x4000, scoped, tag = 'output window, operand 0']
    %14 = vsyncpa [#allocation5], 0
    %s15 = scalar_lea.sflag [#allocation5], 1
    %16 = vsyncpa %s15, 0
    %17 = vsyncpa [#allocation8], 0
    %18 = vsyncpa [#allocation11], 0
    %19 = vsyncpa [#allocation6], 0
    %s20 = scalar_lea.sflag [#allocation6], 1
    %21 = vsyncpa %s20, 0
    loop: start=0, step=1, limit=4
    $region2: #{tpu_custom_call.1} parent=1 // loop_pre_header
      _
    $region3: #{tpu_custom_call.1} parent=1 // loop_header
      %s23 = sphi 0, %s27
      %p24 = scmp.ge.s32.totalorder %s23, 4
      %s33 = sphi 0, %s35
      %s36 = sphi 0, %s33
      %s37 = sphi 0, %s36
      %s53 = sphi 0, %s37
      %s57 = sphi 0, %s57
      %s59 = sphi 0, %s57
      %s60 = sphi 0, %s59
      %s74 = sphi 0, %s60
      %s78 = sphi 0, %s78
      %s80 = sphi 0, %s78
      %s81 = sphi 0, %s80
      %s95 = sphi 0, %s81
      %s99 = sphi 0, %s99
      %s101 = sphi 0, %s99
      %s102 = sphi 0, %s101
      %s116 = sphi 0, %s102
      %s120 = sphi 0, %s120
      %s122 = sphi 0, %s120
      %s123 = sphi 0, %s122
      %s137 = sphi 0, %s123
      %s141 = sphi 0, %s141
      %s143 = sphi 0, %s141
      %s144 = sphi 0, %s143
      %s158 = sphi 0, %s144
      %s162 = sphi 0, %s162
      %s164 = sphi 0, %s162
      %s165 = sphi 0, %s164
      %s179 = sphi 0, %s165
      %s185 = sphi 0, %s187
      %s188 = sphi 0, %s185
      %s189 = sphi 0, %s188
      %s205 = sphi 0, %s189
    $region4: #{tpu_custom_call.1} parent=1 // loop_header_branch
      %26 = sbr.rel (%p24) target = $region8
    $region5: #{tpu_custom_call.1} parent=1 // loop_body
      %s28 = ssub.s32 %s23, 1
      %s29 = ssub.s32 %s23, 2
      %s30 = sadd.s32 %s23, 1
      %s31 = ssub.s32 %s23, %s30
      %p32 = scmp.eq.s32.totalorder %s31, 0
      %s34 = sadd.s32 %s33, 1
      %s35 = scalar_select %p32, %s33, %s34
      %p38 = pneg %p32
      %p39 = scmp.eq.s32.totalorder %s23, 1
      %p40 = por %p38, %p39
      %p41 = scmp.ne.s32.totalorder %s33, %s36
      %p42 = scmp.eq.s32.totalorder %s23, 0
      %p43 = por %p41, %p42
      %p44 = scmp.ne.s32.totalorder %s33, %s36
      %p45 = scmp.eq.s32.totalorder %s28, 1
      %p46 = por %p44, %p45
      %p47 = scmp.ne.s32.totalorder %s36, %s37
      %p48 = scmp.eq.s32.totalorder %s28, 0
      %p49 = por %p47, %p48
      %p50 = scmp.ne.s32.totalorder %s36, %s37
      %p51 = scmp.eq.s32.totalorder %s29, 1
      %p52 = por %p50, %p51
      %p54 = scmp.ne.s32.totalorder %s37, %s53
      %p55 = scmp.eq.s32.totalorder %s29, 0
      %p56 = por %p54, %p55
      %s58 = sadd.s32 %s57, 1
      %p61 = scmp.eq.s32.totalorder %s23, 1
      %p62 = scmp.ne.s32.totalorder %s57, %s59
      %p63 = scmp.eq.s32.totalorder %s23, 0
      %p64 = por %p62, %p63
      %p65 = scmp.ne.s32.totalorder %s57, %s59
      %p66 = scmp.eq.s32.totalorder %s28, 1
      %p67 = por %p65, %p66
      %p68 = scmp.ne.s32.totalorder %s59, %s60
      %p69 = scmp.eq.s32.totalorder %s28, 0
      %p70 = por %p68, %p69
      %p71 = scmp.ne.s32.totalorder %s59, %s60
      %p72 = scmp.eq.s32.totalorder %s29, 1
      %p73 = por %p71, %p72
      %p75 = scmp.ne.s32.totalorder %s60, %s74
      %p76 = scmp.eq.s32.totalorder %s29, 0
      %p77 = por %p75, %p76
      %s79 = sadd.s32 %s78, 1
      %p82 = scmp.eq.s32.totalorder %s23, 1
      %p83 = scmp.ne.s32.totalorder %s78, %s80
      %p84 = scmp.eq.s32.totalorder %s23, 0
      %p85 = por %p83, %p84
      %p86 = scmp.ne.s32.totalorder %s78, %s80
      %p87 = scmp.eq.s32.totalorder %s28, 1
      %p88 = por %p86, %p87
      %p89 = scmp.ne.s32.totalorder %s80, %s81
      %p90 = scmp.eq.s32.totalorder %s28, 0
      %p91 = por %p89, %p90
      %p92 = scmp.ne.s32.totalorder %s80, %s81
      %p93 = scmp.eq.s32.totalorder %s29, 1
      %p94 = por %p92, %p93
      %p96 = scmp.ne.s32.totalorder %s81, %s95
      %p97 = scmp.eq.s32.totalorder %s29, 0
      %p98 = por %p96, %p97
      %s100 = sadd.s32 %s99, 1
      %p103 = scmp.eq.s32.totalorder %s23, 1
      %p104 = scmp.ne.s32.totalorder %s99, %s101
      %p105 = scmp.eq.s32.totalorder %s23, 0
      %p106 = por %p104, %p105
      %p107 = scmp.ne.s32.totalorder %s99, %s101
      %p108 = scmp.eq.s32.totalorder %s28, 1
      %p109 = por %p107, %p108
      %p110 = scmp.ne.s32.totalorder %s101, %s102
      %p111 = scmp.eq.s32.totalorder %s28, 0
      %p112 = por %p110, %p111
      %p113 = scmp.ne.s32.totalorder %s101, %s102
      %p114 = scmp.eq.s32.totalorder %s29, 1
      %p115 = por %p113, %p114
      %p117 = scmp.ne.s32.totalorder %s102, %s116
      %p118 = scmp.eq.s32.totalorder %s29, 0
      %p119 = por %p117, %p118
      %s121 = sadd.s32 %s120, 1
      %p124 = scmp.eq.s32.totalorder %s23, 1
      %p125 = scmp.ne.s32.totalorder %s120, %s122
      %p126 = scmp.eq.s32.totalorder %s23, 0
      %p127 = por %p125, %p126
      %p128 = scmp.ne.s32.totalorder %s120, %s122
      %p129 = scmp.eq.s32.totalorder %s28, 1
      %p130 = por %p128, %p129
      %p131 = scmp.ne.s32.totalorder %s122, %s123
      %p132 = scmp.eq.s32.totalorder %s28, 0
      %p133 = por %p131, %p132
      %p134 = scmp.ne.s32.totalorder %s122, %s123
      %p135 = scmp.eq.s32.totalorder %s29, 1
      %p136 = por %p134, %p135
      %p138 = scmp.ne.s32.totalorder %s123, %s137
      %p139 = scmp.eq.s32.totalorder %s29, 0
      %p140 = por %p138, %p139
      %s142 = sadd.s32 %s141, 1
      %p145 = scmp.eq.s32.totalorder %s23, 1
      %p146 = scmp.ne.s32.totalorder %s141, %s143
      %p147 = scmp.eq.s32.totalorder %s23, 0
      %p148 = por %p146, %p147
      %p149 = scmp.ne.s32.totalorder %s141, %s143
      %p150 = scmp.eq.s32.totalorder %s28, 1
      %p151 = por %p149, %p150
      %p152 = scmp.ne.s32.totalorder %s143, %s144
      %p153 = scmp.eq.s32.totalorder %s28, 0
      %p154 = por %p152, %p153
      %p155 = scmp.ne.s32.totalorder %s143, %s144
      %p156 = scmp.eq.s32.totalorder %s29, 1
      %p157 = por %p155, %p156
      %p159 = scmp.ne.s32.totalorder %s144, %s158
      %p160 = scmp.eq.s32.totalorder %s29, 0
      %p161 = por %p159, %p160
      %s163 = sadd.s32 %s162, 1
      %p166 = scmp.eq.s32.totalorder %s23, 1
      %p167 = scmp.ne.s32.totalorder %s162, %s164
      %p168 = scmp.eq.s32.totalorder %s23, 0
      %p169 = por %p167, %p168
      %p170 = scmp.ne.s32.totalorder %s162, %s164
      %p171 = scmp.eq.s32.totalorder %s28, 1
      %p172 = por %p170, %p171
      %p173 = scmp.ne.s32.totalorder %s164, %s165
      %p174 = scmp.eq.s32.totalorder %s28, 0
      %p175 = por %p173, %p174
      %p176 = scmp.ne.s32.totalorder %s164, %s165
      %p177 = scmp.eq.s32.totalorder %s29, 1
      %p178 = por %p176, %p177
      %p180 = scmp.ne.s32.totalorder %s165, %s179
      %p181 = scmp.eq.s32.totalorder %s29, 0
      %p182 = por %p180, %p181
      %s183 = ssub.s32 %s23, %s30
      %p184 = scmp.eq.s32.totalorder %s183, 0
      %s186 = sadd.s32 %s185, 1
      %s187 = scalar_select %p184, %s185, %s186
      %p190 = pneg %p184
      %p191 = scmp.eq.s32.totalorder %s23, 1
      %p192 = por %p190, %p191
      %p193 = scmp.ne.s32.totalorder %s185, %s188
      %p194 = scmp.eq.s32.totalorder %s23, 0
      %p195 = por %p193, %p194
      %p196 = scmp.ne.s32.totalorder %s185, %s188
      %p197 = scmp.eq.s32.totalorder %s28, 1
      %p198 = por %p196, %p197
      %p199 = scmp.ne.s32.totalorder %s188, %s189
      %p200 = scmp.eq.s32.totalorder %s28, 0
      %p201 = por %p199, %p200
      %p202 = scmp.ne.s32.totalorder %s188, %s189
      %p203 = scmp.eq.s32.totalorder %s29, 1
      %p204 = por %p202, %p203
      %p206 = scmp.ne.s32.totalorder %s189, %s205
      %p207 = scmp.eq.s32.totalorder %s29, 0
      %p208 = por %p206, %p207
      %p209 = scmp.le.s32.totalorder 1, %s23
      %p210 = scmp.lt.s32.totalorder %s23, 3
      %p211 = pnand %p209, %p210
      %p212 = pneg %p211
      // Predicated region
      $region9: #{tpu_custom_call.1} parent=5 // pred_check
        _
      $region10: #{tpu_custom_call.1} parent=5 // pred_check_branch
        %214 = sbr.rel (%p211) target = $region12
      $region11: #{tpu_custom_call.1} parent=5 // pred_region
        %s215 = ssub.s32 %s23, 1
        // Predicated region
        $region13: #{tpu_custom_call.1} parent=11 // pred_check
          %p216 = pneg %p70
        $region14: #{tpu_custom_call.1} parent=11 // pred_check_branch
          %218 = sbr.rel (%p216) target = $region16
        $region15: #{tpu_custom_call.1} parent=11 // pred_region
          %220 = vsyncadd [#allocation8], 0
          %s221 = sshll.u32 %s2, 4
          %s222 = int_to_ptr.hbm [resolvable:$true] %s221
          %s223 = sshll.u32 [#allocation7], 4
          %s224 = int_to_ptr.vmem [resolvable:$true] %s223
          %229 = dma.hbm_to_vmem [thread:$0]  %s222, 12544, %s224, [#allocation8], 128, 128, 8
        $region16: #{tpu_custom_call.1} parent=11 // pred_fallthru
          _
        // Predicated region
        $region17: #{tpu_custom_call.1} parent=11 // pred_check
          %p230 = pneg %p91
        $region18: #{tpu_custom_call.1} parent=11 // pred_check_branch
          %232 = sbr.rel (%p230) target = $region20
        $region19: #{tpu_custom_call.1} parent=11 // pred_region
          _
        $region20: #{tpu_custom_call.1} parent=11 // pred_fallthru
          _
        // Predicated region
        $region21: #{tpu_custom_call.1} parent=11 // pred_check
          %p233 = pneg %p112
        $region22: #{tpu_custom_call.1} parent=11 // pred_check_branch
          %235 = sbr.rel (%p233) target = $region24
        $region23: #{tpu_custom_call.1} parent=11 // pred_region
          %237 = vsyncadd [#allocation8], 0
          %s238 = sshll.u32 %s4, 4
          %s239 = int_to_ptr.hbm [resolvable:$true] %s238
          %s240 = sshll.u32 [#allocation9], 4
          %s241 = int_to_ptr.vmem [resolvable:$true] %s240
          %246 = dma.hbm_to_vmem [thread:$0]  %s239, 4096, %s241, [#allocation8], 128, 128, 8
        $region24: #{tpu_custom_call.1} parent=11 // pred_fallthru
          _
        // Predicated region
        $region25: #{tpu_custom_call.1} parent=11 // pred_check
          %p247 = pneg %p133
        $region26: #{tpu_custom_call.1} parent=11 // pred_check_branch
          %249 = sbr.rel (%p247) target = $region28
        $region27: #{tpu_custom_call.1} parent=11 // pred_region
          _
        $region28: #{tpu_custom_call.1} parent=11 // pred_fallthru
          _
        // Predicated region
        $region29: #{tpu_custom_call.1} parent=11 // pred_check
          %p250 = pneg %p154
        $region30: #{tpu_custom_call.1} parent=11 // pred_check_branch
          %252 = sbr.rel (%p250) target = $region32
        $region31: #{tpu_custom_call.1} parent=11 // pred_region
          %254 = vsyncadd [#allocation11], 0
          %s255 = sshll.u32 %s6, 4
          %s256 = int_to_ptr.hbm [resolvable:$true] %s255
          %s257 = sshll.u32 [#allocation10], 4
          %s258 = int_to_ptr.vmem [resolvable:$true] %s257
          %263 = dma.hbm_to_vmem [thread:$0]  %s256, 2048, %s258, [#allocation11], 64, 64, 4
        $region32: #{tpu_custom_call.1} parent=11 // pred_fallthru
          _
        // Predicated region
        $region33: #{tpu_custom_call.1} parent=11 // pred_check
          %p264 = pneg %p175
        $region34: #{tpu_custom_call.1} parent=11 // pred_check_branch
          %266 = sbr.rel (%p264) target = $region36
        $region35: #{tpu_custom_call.1} parent=11 // pred_region
          _
        $region36: #{tpu_custom_call.1} parent=11 // pred_fallthru
          _
      $region12: #{tpu_custom_call.1} parent=5 // pred_fallthru
        _
      %p267 = scmp.lt.s32.totalorder %s23, 2
      // Predicated region
      $region37: #{tpu_custom_call.1} parent=5 // pred_check
        %p268 = pneg %p267
      $region38: #{tpu_custom_call.1} parent=5 // pred_check_branch
        %270 = sbr.rel (%p268) target = $region40
      $region39: #{tpu_custom_call.1} parent=5 // pred_region
        // Predicated region
        $region41: #{tpu_custom_call.1} parent=39 // pred_check
          %p271 = pneg %p43
        $region42: #{tpu_custom_call.1} parent=39 // pred_check_branch
          %273 = sbr.rel (%p271) target = $region44
        $region43: #{tpu_custom_call.1} parent=39 // pred_region
          %s274 = sand.u32 %s33, 1
          %s275 = scalar_lea.sflag [#allocation5], %s274
          %s276 = sand.u32 %s33, 1
          %s277 = smul.addr %s276, 56
          %s278 = scalar_lea.vmem [#allocation4], %s277
          %s279 = smul.u32 2, %s23
          %281 = vsyncadd %s275, 0
          %s282 = smul.addr %s279, 7
          %s283 = smul.addr %s282, 4
          %s284 = scalar_lea.hbm %s1, %s283
          %s285 = sshll.u32 %s284, 4
          %s286 = int_to_ptr.hbm [resolvable:$true] %s285
          %s287 = sshll.u32 %s278, 4
          %s288 = int_to_ptr.vmem [resolvable:$true] %s287
          %293 = dma.hbm_to_vmem [thread:$0]  %s286, 896, %s288, %s275, 448, 448, 28
        $region44: #{tpu_custom_call.1} parent=39 // pred_fallthru
          _
      $region40: #{tpu_custom_call.1} parent=5 // pred_fallthru
        _
      %p294 = scmp.le.s32.totalorder 1, %s23
      %p295 = scmp.lt.s32.totalorder %s23, 3
      %p296 = pnand %p294, %p295
      %p297 = pneg %p296
      // Predicated region
      $region45: #{tpu_custom_call.1} parent=5 // pred_check
        _
      $region46: #{tpu_custom_call.1} parent=5 // pred_check_branch
        %299 = sbr.rel (%p296) target = $region48
      $region47: #{tpu_custom_call.1} parent=5 // pred_region
        %s300 = ssub.s32 %s23, 1
        %s301 = sand.u32 %s36, 1
        %s302 = scalar_lea.sflag [#allocation5], %s301
        %s303 = sand.u32 %s36, 1
        %s304 = smul.addr %s303, 56
        %s305 = scalar_lea.vmem [#allocation4], %s304
        // Predicated region
        $region49: #{tpu_custom_call.1} parent=47 // pred_check
          %p306 = pneg %p49
        $region50: #{tpu_custom_call.1} parent=47 // pred_check_branch
          %308 = sbr.rel (%p306) target = $region52
        $region51: #{tpu_custom_call.1} parent=47 // pred_region
          %310 = dma.done %s302, 896
        $region52: #{tpu_custom_call.1} parent=47 // pred_fallthru
          _
        // Predicated region
        $region53: #{tpu_custom_call.1} parent=47 // pred_check
          %p311 = pneg %p70
        $region54: #{tpu_custom_call.1} parent=47 // pred_check_branch
          %313 = sbr.rel (%p311) target = $region56
        $region55: #{tpu_custom_call.1} parent=47 // pred_region
          %315 = dma.done [#allocation8], 12544
        $region56: #{tpu_custom_call.1} parent=47 // pred_fallthru
          _
        // Predicated region
        $region57: #{tpu_custom_call.1} parent=47 // pred_check
          %p316 = pneg %p112
        $region58: #{tpu_custom_call.1} parent=47 // pred_check_branch
          %318 = sbr.rel (%p316) target = $region60
        $region59: #{tpu_custom_call.1} parent=47 // pred_region
          %320 = dma.done [#allocation8], 4096
        $region60: #{tpu_custom_call.1} parent=47 // pred_fallthru
          _
        // Predicated region
        $region61: #{tpu_custom_call.1} parent=47 // pred_check
          %p321 = pneg %p154
        $region62: #{tpu_custom_call.1} parent=47 // pred_check_branch
          %323 = sbr.rel (%p321) target = $region64
        $region63: #{tpu_custom_call.1} parent=47 // pred_region
          %325 = dma.done [#allocation11], 2048
        $region64: #{tpu_custom_call.1} parent=47 // pred_fallthru
          _
        %s326 = sand.u32 %s36, 1
        %s327 = scalar_lea.sflag [#allocation5], %s326
        %s328 = sand.u32 %s36, 1
        %s329 = smul.addr %s328, 56
        %s330 = scalar_lea.vmem [#allocation4], %s329
        %p331 = pneg %p49
        %p332 = pneg %p46
        %p333 = pneg %p70
        %p334 = pneg %p67
        %p335 = pneg %p91
        %p336 = pneg %p88
        %p337 = pneg %p112
        %p338 = pneg %p109
        %p339 = pneg %p133
        %p340 = pneg %p130
        %p341 = pneg %p154
        %p342 = pneg %p151
        %p343 = pneg %p175
        %p344 = pneg %p172
        %p345 = pneg %p201
        %p346 = pneg %p198
        %s347 = sand.u32 %s188, 1
        %s348 = scalar_lea.sflag [#allocation6], %s347
        %s349 = sand.u32 %s188, 1
        %s350 = smul.addr %s349, 16
        %s351 = scalar_lea.vmem [#allocation12], %s350
        %s352 = smul.u32 2, %s28
        %s353 = smul.u32 2, %s28
        %v355 = vld [vmem:[%s305] sm:$0xff]
        %v356 = vld [vmem:[%s305 + $0x8] sm:$0xff]
        %v357 = vld [vmem:[%s305 + $0x10] sm:$0xff]
        %v358 = vld [vmem:[%s305 + $0x18] sm:$0xf]
        %v359 = vld [vmem:[%s305 + $0x1c] sm:$0xff]
        %v360 = vld [vmem:[%s305 + $0x24] sm:$0xff]
        %v361 = vld [vmem:[%s305 + $0x2c] sm:$0xff]
        %v362 = vld [vmem:[%s305 + $0x34] sm:$0xf]
        %v363 = vld [vmem:[#allocation7] sm:$0xff]
        %v364 = vld [vmem:[#allocation7 + $0x8] sm:$0xff]
        %v365 = vld [vmem:[#allocation7 + $0x10] sm:$0xff]
        %v366 = vld [vmem:[#allocation7 + $0x18] sm:$0xff]
        %v367 = vld [vmem:[#allocation7 + $0x20] sm:$0xff]
        %v368 = vld [vmem:[#allocation7 + $0x28] sm:$0xff]
        %v369 = vld [vmem:[#allocation7 + $0x30] sm:$0xff]
        %v370 = vld [vmem:[#allocation7 + $0x38] sm:$0xff]
        %v371 = vld [vmem:[#allocation7 + $0x40] sm:$0xff]
        %v372 = vld [vmem:[#allocation7 + $0x48] sm:$0xff]
        %v373 = vld [vmem:[#allocation7 + $0x50] sm:$0xff]
        %v374 = vld [vmem:[#allocation7 + $0x58] sm:$0xff]
        %v375 = vld [vmem:[#allocation7 + $0x60] sm:$0xff]
        %v376 = vld [vmem:[#allocation7 + $0x68] sm:$0xff]
        %v377 = vld [vmem:[#allocation7 + $0x70] sm:$0xff]
        %v378 = vld [vmem:[#allocation7 + $0x78] sm:$0xff]
        %v379 = vld [vmem:[#allocation7 + $0x80] sm:$0xff]
        %v380 = vld [vmem:[#allocation7 + $0x88] sm:$0xff]
        %v381 = vld [vmem:[#allocation7 + $0x90] sm:$0xff]
        %v382 = vld [vmem:[#allocation7 + $0x98] sm:$0xff]
        %v383 = vld [vmem:[#allocation7 + $0xa0] sm:$0xff]
        %v384 = vld [vmem:[#allocation7 + $0xa8] sm:$0xff]
        %v385 = vld [vmem:[#allocation7 + $0xb0] sm:$0xff]
        %v386 = vld [vmem:[#allocation7 + $0xb8] sm:$0xff]
        %v387 = vld [vmem:[#allocation7 + $0xc0] sm:$0xff]
        %v388 = vld [vmem:[#allocation7 + $0xc8] sm:$0xff]
        %v389 = vld [vmem:[#allocation7 + $0xd0] sm:$0xff]
        %v390 = vld [vmem:[#allocation7 + $0xd8] sm:$0xff]
        %v391 = vld [vmem:[#allocation7 + $0xe0] sm:$0xff]
        %v392 = vld [vmem:[#allocation7 + $0xe8] sm:$0xff]
        %v393 = vld [vmem:[#allocation7 + $0xf0] sm:$0xff]
        %v394 = vld [vmem:[#allocation7 + $0xf8] sm:$0xff]
        %v395 = vld [vmem:[#allocation7 + $0x100] sm:$0xff]
        %v396 = vld [vmem:[#allocation7 + $0x108] sm:$0xff]
        %v397 = vld [vmem:[#allocation7 + $0x110] sm:$0xff]
        %v398 = vld [vmem:[#allocation7 + $0x118] sm:$0xff]
        %v399 = vld [vmem:[#allocation7 + $0x120] sm:$0xff]
        %v400 = vld [vmem:[#allocation7 + $0x128] sm:$0xff]
        %v401 = vld [vmem:[#allocation7 + $0x130] sm:$0xff]
        %v402 = vld [vmem:[#allocation7 + $0x138] sm:$0xff]
        %v403 = vld [vmem:[#allocation7 + $0x140] sm:$0xff]
        %v404 = vld [vmem:[#allocation7 + $0x148] sm:$0xff]
        %v405 = vld [vmem:[#allocation7 + $0x150] sm:$0xff]
        %v406 = vld [vmem:[#allocation7 + $0x158] sm:$0xff]
        %v407 = vld [vmem:[#allocation7 + $0x160] sm:$0xff]
        %v408 = vld [vmem:[#allocation7 + $0x168] sm:$0xff]
        %v409 = vld [vmem:[#allocation7 + $0x170] sm:$0xff]
        %v410 = vld [vmem:[#allocation7 + $0x178] sm:$0xff]
        %v411 = vld [vmem:[#allocation7 + $0x180] sm:$0xff]
        %v412 = vld [vmem:[#allocation7 + $0x188] sm:$0xff]
        %v413 = vld [vmem:[#allocation7 + $0x190] sm:$0xff]
        %v414 = vld [vmem:[#allocation7 + $0x198] sm:$0xff]
        %v415 = vld [vmem:[#allocation7 + $0x1a0] sm:$0xff]
        %v416 = vld [vmem:[#allocation7 + $0x1a8] sm:$0xff]
        %v417 = vld [vmem:[#allocation7 + $0x1b0] sm:$0xff]
        %v418 = vld [vmem:[#allocation7 + $0x1b8] sm:$0xff]
        %v419 = vld [vmem:[#allocation7 + $0x1c0] sm:$0xff]
        %v420 = vld [vmem:[#allocation7 + $0x1c8] sm:$0xff]
        %v421 = vld [vmem:[#allocation7 + $0x1d0] sm:$0xff]
        %v422 = vld [vmem:[#allocation7 + $0x1d8] sm:$0xff]
        %v423 = vld [vmem:[#allocation7 + $0x1e0] sm:$0xff]
        %v424 = vld [vmem:[#allocation7 + $0x1e8] sm:$0xff]
        %v425 = vld [vmem:[#allocation7 + $0x1f0] sm:$0xff]
        %v426 = vld [vmem:[#allocation7 + $0x1f8] sm:$0xff]
        %v427 = vld [vmem:[#allocation7 + $0x200] sm:$0xff]
        %v428 = vld [vmem:[#allocation7 + $0x208] sm:$0xff]
        %v429 = vld [vmem:[#allocation7 + $0x210] sm:$0xff]
        %v430 = vld [vmem:[#allocation7 + $0x218] sm:$0xff]
        %v431 = vld [vmem:[#allocation7 + $0x220] sm:$0xff]
        %v432 = vld [vmem:[#allocation7 + $0x228] sm:$0xff]
        %v433 = vld [vmem:[#allocation7 + $0x230] sm:$0xff]
        %v434 = vld [vmem:[#allocation7 + $0x238] sm:$0xff]
        %v435 = vld [vmem:[#allocation7 + $0x240] sm:$0xff]
        %v436 = vld [vmem:[#allocation7 + $0x248] sm:$0xff]
        %v437 = vld [vmem:[#allocation7 + $0x250] sm:$0xff]
        %v438 = vld [vmem:[#allocation7 + $0x258] sm:$0xff]
        %v439 = vld [vmem:[#allocation7 + $0x260] sm:$0xff]
        %v440 = vld [vmem:[#allocation7 + $0x268] sm:$0xff]
        %v441 = vld [vmem:[#allocation7 + $0x270] sm:$0xff]
        %v442 = vld [vmem:[#allocation7 + $0x278] sm:$0xff]
        %v443 = vld [vmem:[#allocation7 + $0x280] sm:$0xff]
        %v444 = vld [vmem:[#allocation7 + $0x288] sm:$0xff]
        %v445 = vld [vmem:[#allocation7 + $0x290] sm:$0xff]
        %v446 = vld [vmem:[#allocation7 + $0x298] sm:$0xff]
        %v447 = vld [vmem:[#allocation7 + $0x2a0] sm:$0xff]
        %v448 = vld [vmem:[#allocation7 + $0x2a8] sm:$0xff]
        %v449 = vld [vmem:[#allocation7 + $0x2b0] sm:$0xff]
        %v450 = vld [vmem:[#allocation7 + $0x2b8] sm:$0xff]
        %v451 = vld [vmem:[#allocation7 + $0x2c0] sm:$0xff]
        %v452 = vld [vmem:[#allocation7 + $0x2c8] sm:$0xff]
        %v453 = vld [vmem:[#allocation7 + $0x2d0] sm:$0xff]
        %v454 = vld [vmem:[#allocation7 + $0x2d8] sm:$0xff]
        %v455 = vld [vmem:[#allocation7 + $0x2e0] sm:$0xff]
        %v456 = vld [vmem:[#allocation7 + $0x2e8] sm:$0xff]
        %v457 = vld [vmem:[#allocation7 + $0x2f0] sm:$0xff]
        %v458 = vld [vmem:[#allocation7 + $0x2f8] sm:$0xff]
        %v459 = vld [vmem:[#allocation7 + $0x300] sm:$0xff]
        %v460 = vld [vmem:[#allocation7 + $0x308] sm:$0xff]
        %v461 = vld [vmem:[%s3] sm:$0x3]
        %v463 = vperm.slane %v461, 0
        %v464 = vperm.slane %v461, 1
        %v475 = vunpack.c.l.b16 %v355
        %v476 = vunpack.c.h.b16 %v355
        %v477 = vunpack.c.l.b16 %v356
        %v478 = vunpack.c.h.b16 %v356
        %v479 = vunpack.c.l.b16 %v357
        %v480 = vunpack.c.h.b16 %v357
        %v481 = vunpack.c.l.b16 %v358
        %v482 = vunpack.c.l.b16 %v359
        %v483 = vunpack.c.h.b16 %v359
        %v484 = vunpack.c.l.b16 %v360
        %v485 = vunpack.c.h.b16 %v360
        %v486 = vunpack.c.l.b16 %v361
        %v487 = vunpack.c.h.b16 %v361
        %v488 = vunpack.c.l.b16 %v362
        %v489 = vpack.c.b16 %v482, %v475
        %v490 = vpack.c.b16 %v483, %v476
        %v491 = vpack.c.b16 %v484, %v477
        %v492 = vpack.c.b16 %v485, %v478
        %v493 = vpack.c.b16 %v486, %v479
        %v494 = vpack.c.b16 %v487, %v480
        %v495 = vpack.c.b16 %v488, %v481
        %v600 = vunpack.c.l.b16 %v363
        %v601 = vunpack.c.h.b16 %v363
        %v602 = vunpack.c.l.b16 %v364
        %v603 = vunpack.c.h.b16 %v364
        %v604 = vunpack.c.l.b16 %v365
        %v605 = vunpack.c.h.b16 %v365
        %v606 = vunpack.c.l.b16 %v366
        %v607 = vunpack.c.h.b16 %v366
        %v608 = vunpack.c.l.b16 %v367
        %v609 = vunpack.c.h.b16 %v367
        %v610 = vunpack.c.l.b16 %v368
        %v611 = vunpack.c.h.b16 %v368
        %v612 = vunpack.c.l.b16 %v369
        %v613 = vunpack.c.h.b16 %v369
        %v614 = vunpack.c.l.b16 %v370
        %v615 = vunpack.c.h.b16 %v370
        %v616 = vunpack.c.l.b16 %v371
        %v617 = vunpack.c.h.b16 %v371
        %v618 = vunpack.c.l.b16 %v372
        %v619 = vunpack.c.h.b16 %v372
        %v620 = vunpack.c.l.b16 %v373
        %v621 = vunpack.c.h.b16 %v373
        %v622 = vunpack.c.l.b16 %v374
        %v623 = vunpack.c.h.b16 %v374
        %v624 = vunpack.c.l.b16 %v375
        %v625 = vunpack.c.h.b16 %v375
        %v626 = vunpack.c.l.b16 %v376
        %v627 = vunpack.c.h.b16 %v376
        %v628 = vunpack.c.l.b16 %v377
        %v629 = vunpack.c.h.b16 %v377
        %v630 = vunpack.c.l.b16 %v378
        %v631 = vunpack.c.h.b16 %v378
        %v632 = vunpack.c.l.b16 %v379
        %v633 = vunpack.c.h.b16 %v379
        %v634 = vunpack.c.l.b16 %v380
        %v635 = vunpack.c.h.b16 %v380
        %v636 = vunpack.c.l.b16 %v381
        %v637 = vunpack.c.h.b16 %v381
        %v638 = vunpack.c.l.b16 %v382
        %v639 = vunpack.c.h.b16 %v382
        %v640 = vunpack.c.l.b16 %v383
        %v641 = vunpack.c.h.b16 %v383
        %v642 = vunpack.c.l.b16 %v384
        %v643 = vunpack.c.h.b16 %v384
        %v644 = vunpack.c.l.b16 %v385
        %v645 = vunpack.c.h.b16 %v385
        %v646 = vunpack.c.l.b16 %v386
        %v647 = vunpack.c.h.b16 %v386
        %v648 = vunpack.c.l.b16 %v387
        %v649 = vunpack.c.h.b16 %v387
        %v650 = vunpack.c.l.b16 %v388
        %v651 = vunpack.c.h.b16 %v388
        %v652 = vunpack.c.l.b16 %v389
        %v653 = vunpack.c.h.b16 %v389
        %v654 = vunpack.c.l.b16 %v390
        %v655 = vunpack.c.h.b16 %v390
        %v656 = vunpack.c.l.b16 %v391
        %v657 = vunpack.c.h.b16 %v391
        %v658 = vunpack.c.l.b16 %v392
        %v659 = vunpack.c.h.b16 %v392
        %v660 = vunpack.c.l.b16 %v393
        %v661 = vunpack.c.h.b16 %v393
        %v662 = vunpack.c.l.b16 %v394
        %v663 = vunpack.c.h.b16 %v394
        %v664 = vunpack.c.l.b16 %v395
        %v665 = vunpack.c.h.b16 %v395
        %v666 = vunpack.c.l.b16 %v396
        %v667 = vunpack.c.h.b16 %v396
        %v668 = vunpack.c.l.b16 %v397
        %v669 = vunpack.c.h.b16 %v397
        %v670 = vunpack.c.l.b16 %v398
        %v671 = vunpack.c.h.b16 %v398
        %v672 = vunpack.c.l.b16 %v399
        %v673 = vunpack.c.h.b16 %v399
        %v674 = vunpack.c.l.b16 %v400
        %v675 = vunpack.c.h.b16 %v400
        %v676 = vunpack.c.l.b16 %v401
        %v677 = vunpack.c.h.b16 %v401
        %v678 = vunpack.c.l.b16 %v402
        %v679 = vunpack.c.h.b16 %v402
        %v680 = vunpack.c.l.b16 %v403
        %v681 = vunpack.c.h.b16 %v403
        %v682 = vunpack.c.l.b16 %v404
        %v683 = vunpack.c.h.b16 %v404
        %v684 = vunpack.c.l.b16 %v405
        %v685 = vunpack.c.h.b16 %v405
        %v686 = vunpack.c.l.b16 %v406
        %v687 = vunpack.c.h.b16 %v406
        %v688 = vunpack.c.l.b16 %v407
        %v689 = vunpack.c.h.b16 %v407
        %v690 = vunpack.c.l.b16 %v408
        %v691 = vunpack.c.h.b16 %v408
        %v692 = vunpack.c.l.b16 %v409
        %v693 = vunpack.c.h.b16 %v409
        %v694 = vunpack.c.l.b16 %v410
        %v695 = vunpack.c.h.b16 %v410
        %v696 = vunpack.c.l.b16 %v411
        %v697 = vunpack.c.h.b16 %v411
        %v698 = vunpack.c.l.b16 %v412
        %v699 = vunpack.c.h.b16 %v412
        %v700 = vunpack.c.l.b16 %v413
        %v701 = vunpack.c.h.b16 %v413
        %v702 = vunpack.c.l.b16 %v414
        %v703 = vunpack.c.h.b16 %v414
        %v704 = vunpack.c.l.b16 %v415
        %v705 = vunpack.c.h.b16 %v415
        %v706 = vunpack.c.l.b16 %v416
        %v707 = vunpack.c.h.b16 %v416
        %v708 = vunpack.c.l.b16 %v417
        %v709 = vunpack.c.h.b16 %v417
        %v710 = vunpack.c.l.b16 %v418
        %v711 = vunpack.c.h.b16 %v418
        %v712 = vunpack.c.l.b16 %v419
        %v713 = vunpack.c.h.b16 %v419
        %v714 = vunpack.c.l.b16 %v420
        %v715 = vunpack.c.h.b16 %v420
        %v716 = vunpack.c.l.b16 %v421
        %v717 = vunpack.c.h.b16 %v421
        %v718 = vunpack.c.l.b16 %v422
        %v719 = vunpack.c.h.b16 %v422
        %v720 = vunpack.c.l.b16 %v423
        %v721 = vunpack.c.h.b16 %v423
        %v722 = vunpack.c.l.b16 %v424
        %v723 = vunpack.c.h.b16 %v424
        %v724 = vunpack.c.l.b16 %v425
        %v725 = vunpack.c.h.b16 %v425
        %v726 = vunpack.c.l.b16 %v426
        %v727 = vunpack.c.h.b16 %v426
        %v728 = vunpack.c.l.b16 %v427
        %v729 = vunpack.c.h.b16 %v427
        %v730 = vunpack.c.l.b16 %v428
        %v731 = vunpack.c.h.b16 %v428
        %v732 = vunpack.c.l.b16 %v429
        %v733 = vunpack.c.h.b16 %v429
        %v734 = vunpack.c.l.b16 %v430
        %v735 = vunpack.c.h.b16 %v430
        %v736 = vunpack.c.l.b16 %v431
        %v737 = vunpack.c.h.b16 %v431
        %v738 = vunpack.c.l.b16 %v432
        %v739 = vunpack.c.h.b16 %v432
        %v740 = vunpack.c.l.b16 %v433
        %v741 = vunpack.c.h.b16 %v433
        %v742 = vunpack.c.l.b16 %v434
        %v743 = vunpack.c.h.b16 %v434
        %v744 = vunpack.c.l.b16 %v435
        %v745 = vunpack.c.h.b16 %v435
        %v746 = vunpack.c.l.b16 %v436
        %v747 = vunpack.c.h.b16 %v436
        %v748 = vunpack.c.l.b16 %v437
        %v749 = vunpack.c.h.b16 %v437
        %v750 = vunpack.c.l.b16 %v438
        %v751 = vunpack.c.h.b16 %v438
        %v752 = vunpack.c.l.b16 %v439
        %v753 = vunpack.c.h.b16 %v439
        %v754 = vunpack.c.l.b16 %v440
        %v755 = vunpack.c.h.b16 %v440
        %v756 = vunpack.c.l.b16 %v441
        %v757 = vunpack.c.h.b16 %v441
        %v758 = vunpack.c.l.b16 %v442
        %v759 = vunpack.c.h.b16 %v442
        %v760 = vunpack.c.l.b16 %v443
        %v761 = vunpack.c.h.b16 %v443
        %v762 = vunpack.c.l.b16 %v444
        %v763 = vunpack.c.h.b16 %v444
        %v764 = vunpack.c.l.b16 %v445
        %v765 = vunpack.c.h.b16 %v445
        %v766 = vunpack.c.l.b16 %v446
        %v767 = vunpack.c.h.b16 %v446
        %v768 = vunpack.c.l.b16 %v447
        %v769 = vunpack.c.h.b16 %v447
        %v770 = vunpack.c.l.b16 %v448
        %v771 = vunpack.c.h.b16 %v448
        %v772 = vunpack.c.l.b16 %v449
        %v773 = vunpack.c.h.b16 %v449
        %v774 = vunpack.c.l.b16 %v450
        %v775 = vunpack.c.h.b16 %v450
        %v776 = vunpack.c.l.b16 %v451
        %v777 = vunpack.c.h.b16 %v451
        %v778 = vunpack.c.l.b16 %v452
        %v779 = vunpack.c.h.b16 %v452
        %v780 = vunpack.c.l.b16 %v453
        %v781 = vunpack.c.h.b16 %v453
        %v782 = vunpack.c.l.b16 %v454
        %v783 = vunpack.c.h.b16 %v454
        %v784 = vunpack.c.l.b16 %v455
        %v785 = vunpack.c.h.b16 %v455
        %v786 = vunpack.c.l.b16 %v456
        %v787 = vunpack.c.h.b16 %v456
        %v788 = vunpack.c.l.b16 %v457
        %v789 = vunpack.c.h.b16 %v457
        %v790 = vunpack.c.l.b16 %v458
        %v791 = vunpack.c.h.b16 %v458
        %v792 = vunpack.c.l.b16 %v459
        %v793 = vunpack.c.h.b16 %v459
        %v794 = vunpack.c.l.b16 %v460
        %v795 = vunpack.c.h.b16 %v460
        %v796 = vpack.c.b16 %v602, %v600
        %v797 = vpack.c.b16 %v603, %v601
        %v798 = vpack.c.b16 %v606, %v604
        %v799 = vpack.c.b16 %v607, %v605
        %v800 = vpack.c.b16 %v610, %v608
        %v801 = vpack.c.b16 %v611, %v609
        %v802 = vpack.c.b16 %v614, %v612
        %v803 = vpack.c.b16 %v615, %v613
        %v804 = vpack.c.b16 %v618, %v616
        %v805 = vpack.c.b16 %v619, %v617
        %v806 = vpack.c.b16 %v622, %v620
        %v807 = vpack.c.b16 %v623, %v621
        %v808 = vpack.c.b16 %v626, %v624
        %v809 = vpack.c.b16 %v627, %v625
        %v810 = vpack.c.b16 %v630, %v628
        %v811 = vpack.c.b16 %v631, %v629
        %v812 = vpack.c.b16 %v634, %v632
        %v813 = vpack.c.b16 %v635, %v633
        %v814 = vpack.c.b16 %v638, %v636
        %v815 = vpack.c.b16 %v639, %v637
        %v816 = vpack.c.b16 %v642, %v640
        %v817 = vpack.c.b16 %v643, %v641
        %v818 = vpack.c.b16 %v646, %v644
        %v819 = vpack.c.b16 %v647, %v645
        %v820 = vpack.c.b16 %v650, %v648
        %v821 = vpack.c.b16 %v651, %v649
        %v822 = vpack.c.b16 %v654, %v652
        %v823 = vpack.c.b16 %v655, %v653
        %v824 = vpack.c.b16 %v658, %v656
        %v825 = vpack.c.b16 %v659, %v657
        %v826 = vpack.c.b16 %v662, %v660
        %v827 = vpack.c.b16 %v663, %v661
        %v828 = vpack.c.b16 %v666, %v664
        %v829 = vpack.c.b16 %v667, %v665
        %v830 = vpack.c.b16 %v670, %v668
        %v831 = vpack.c.b16 %v671, %v669
        %v832 = vpack.c.b16 %v674, %v672
        %v833 = vpack.c.b16 %v675, %v673
        %v834 = vpack.c.b16 %v678, %v676
        %v835 = vpack.c.b16 %v679, %v677
        %v836 = vpack.c.b16 %v682, %v680
        %v837 = vpack.c.b16 %v683, %v681
        %v838 = vpack.c.b16 %v686, %v684
        %v839 = vpack.c.b16 %v687, %v685
        %v840 = vpack.c.b16 %v690, %v688
        %v841 = vpack.c.b16 %v691, %v689
        %v842 = vpack.c.b16 %v694, %v692
        %v843 = vpack.c.b16 %v695, %v693
        %v844 = vpack.c.b16 %v698, %v696
        %v845 = vpack.c.b16 %v699, %v697
        %v846 = vpack.c.b16 %v702, %v700
        %v847 = vpack.c.b16 %v703, %v701
        %v848 = vpack.c.b16 %v706, %v704
        %v849 = vpack.c.b16 %v707, %v705
        %v850 = vpack.c.b16 %v710, %v708
        %v851 = vpack.c.b16 %v711, %v709
        %v852 = vpack.c.b16 %v714, %v712
        %v853 = vpack.c.b16 %v715, %v713
        %v854 = vpack.c.b16 %v718, %v716
        %v855 = vpack.c.b16 %v719, %v717
        %v856 = vpack.c.b16 %v722, %v720
        %v857 = vpack.c.b16 %v723, %v721
        %v858 = vpack.c.b16 %v726, %v724
        %v859 = vpack.c.b16 %v727, %v725
        %v860 = vpack.c.b16 %v730, %v728
        %v861 = vpack.c.b16 %v731, %v729
        %v862 = vpack.c.b16 %v734, %v732
        %v863 = vpack.c.b16 %v735, %v733
        %v864 = vpack.c.b16 %v738, %v736
        %v865 = vpack.c.b16 %v739, %v737
        %v866 = vpack.c.b16 %v742, %v740
        %v867 = vpack.c.b16 %v743, %v741
        %v868 = vpack.c.b16 %v746, %v744
        %v869 = vpack.c.b16 %v747, %v745
        %v870 = vpack.c.b16 %v750, %v748
        %v871 = vpack.c.b16 %v751, %v749
        %v872 = vpack.c.b16 %v754, %v752
        %v873 = vpack.c.b16 %v755, %v753
        %v874 = vpack.c.b16 %v758, %v756
        %v875 = vpack.c.b16 %v759, %v757
        %v876 = vpack.c.b16 %v762, %v760
        %v877 = vpack.c.b16 %v763, %v761
        %v878 = vpack.c.b16 %v766, %v764
        %v879 = vpack.c.b16 %v767, %v765
        %v880 = vpack.c.b16 %v770, %v768
        %v881 = vpack.c.b16 %v771, %v769
        %v882 = vpack.c.b16 %v774, %v772
        %v883 = vpack.c.b16 %v775, %v773
        %v884 = vpack.c.b16 %v778, %v776
        %v885 = vpack.c.b16 %v779, %v777
        %v886 = vpack.c.b16 %v782, %v780
        %v887 = vpack.c.b16 %v783, %v781
        %v888 = vpack.c.b16 %v786, %v784
        %v889 = vpack.c.b16 %v787, %v785
        %v890 = vpack.c.b16 %v790, %v788
        %v891 = vpack.c.b16 %v791, %v789
        %v892 = vpack.c.b16 %v794, %v792
        %v893 = vpack.c.b16 %v795, %v793
        %vm992 = vcmask 130048
        %v994 = vsel %vm992, %v495, 0
        %996 = vmatpush.bf16.msra.mxu0 %v810
        %997 = vmatpush.bf16.msra.mxu0 %v808
        %998 = vmatpush.bf16.msra.mxu0 %v806
        %999 = vmatpush.bf16.msra.mxu0 %v804
        %1000 = vmatpush.bf16.msra.mxu0 %v802
        %1001 = vmatpush.bf16.msra.mxu0 %v800
        %1002 = vmatpush.bf16.msra.mxu0 %v798
        %1003 = vmatpush.bf16.msra.mxu0 %v796
        %1004 = vmatmul.bf16.gmra.mxu0 %v489
        %v1005 = vpop.f32.mrf.mxu0
        %v1006 = vadd.f32 %v463, %v1005
        %v1007 = vpop.f32.mrf.mxu0
        %v1008 = vadd.f32 %v463, %v1007
        %1009 = vdwg.mxu0
        %1010 = vmatpush.bf16.msra.mxu0 %v826
        %1011 = vmatpush.bf16.msra.mxu0 %v824
        %1012 = vmatpush.bf16.msra.mxu0 %v822
        %1013 = vmatpush.bf16.msra.mxu0 %v820
        %1014 = vmatpush.bf16.msra.mxu0 %v818
        %1015 = vmatpush.bf16.msra.mxu0 %v816
        %1016 = vmatpush.bf16.msra.mxu0 %v814
        %1017 = vmatpush.bf16.msra.mxu0 %v812
        %1018 = vmatmul.bf16.gmra.mxu0 %v490
        %v1019 = vpop.f32.mrf.mxu0
        %v1020 = vadd.f32 %v1006, %v1019
        %v1021 = vpop.f32.mrf.mxu0
        %v1022 = vadd.f32 %v1008, %v1021
        %1023 = vdwg.mxu0
        %1024 = vmatpush.bf16.msra.mxu0 %v842
        %1025 = vmatpush.bf16.msra.mxu0 %v840
        %1026 = vmatpush.bf16.msra.mxu0 %v838
        %1027 = vmatpush.bf16.msra.mxu0 %v836
        %1028 = vmatpush.bf16.msra.mxu0 %v834
        %1029 = vmatpush.bf16.msra.mxu0 %v832
        %1030 = vmatpush.bf16.msra.mxu0 %v830
        %1031 = vmatpush.bf16.msra.mxu0 %v828
        %1032 = vmatmul.bf16.gmra.mxu0 %v491
        %v1033 = vpop.f32.mrf.mxu0
        %v1034 = vadd.f32 %v1020, %v1033
        %v1035 = vpop.f32.mrf.mxu0
        %v1036 = vadd.f32 %v1022, %v1035
        %1037 = vdwg.mxu0
        %1038 = vmatpush.bf16.msra.mxu0 %v858
        %1039 = vmatpush.bf16.msra.mxu0 %v856
        %1040 = vmatpush.bf16.msra.mxu0 %v854
        %1041 = vmatpush.bf16.msra.mxu0 %v852
        %1042 = vmatpush.bf16.msra.mxu0 %v850
        %1043 = vmatpush.bf16.msra.mxu0 %v848
        %1044 = vmatpush.bf16.msra.mxu0 %v846
        %1045 = vmatpush.bf16.msra.mxu0 %v844
        %1046 = vmatmul.bf16.gmra.mxu0 %v492
        %v1047 = vpop.f32.mrf.mxu0
        %v1048 = vadd.f32 %v1034, %v1047
        %v1049 = vpop.f32.mrf.mxu0
        %v1050 = vadd.f32 %v1036, %v1049
        %1051 = vdwg.mxu0
        %1052 = vmatpush.bf16.msra.mxu0 %v874
        %1053 = vmatpush.bf16.msra.mxu0 %v872
        %1054 = vmatpush.bf16.msra.mxu0 %v870
        %1055 = vmatpush.bf16.msra.mxu0 %v868
        %1056 = vmatpush.bf16.msra.mxu0 %v866
        %1057 = vmatpush.bf16.msra.mxu0 %v864
        %1058 = vmatpush.bf16.msra.mxu0 %v862
        %1059 = vmatpush.bf16.msra.mxu0 %v860
        %1060 = vmatmul.bf16.gmra.mxu0 %v493
        %v1061 = vpop.f32.mrf.mxu0
        %v1062 = vadd.f32 %v1048, %v1061
        %v1063 = vpop.f32.mrf.mxu0
        %v1064 = vadd.f32 %v1050, %v1063
        %1065 = vdwg.mxu0
        %1066 = vmatpush.bf16.msra.mxu0 %v890
        %1067 = vmatpush.bf16.msra.mxu0 %v888
        %1068 = vmatpush.bf16.msra.mxu0 %v886
        %1069 = vmatpush.bf16.msra.mxu0 %v884
        %1070 = vmatpush.bf16.msra.mxu0 %v882
        %1071 = vmatpush.bf16.msra.mxu0 %v880
        %1072 = vmatpush.bf16.msra.mxu0 %v878
        %1073 = vmatpush.bf16.msra.mxu0 %v876
        %1074 = vmatmul.bf16.gmra.mxu0 %v494
        %v1075 = vpop.f32.mrf.mxu0
        %v1076 = vadd.f32 %v1062, %v1075
        %v1077 = vpop.f32.mrf.mxu0
        %v1078 = vadd.f32 %v1064, %v1077
        %1079 = vdwg.mxu0
        %1080 = vmatpush.bf16.msra.mxu0 0
        %1081 = vmatpush.bf16.msra.mxu0 0
        %1082 = vmatpush.bf16.msra.mxu0 0
        %1083 = vmatpush.bf16.msra.mxu0 0
        %1084 = vmatpush.bf16.msra.mxu0 0
        %1085 = vmatpush.bf16.msra.mxu0 0
        %1086 = vmatpush.bf16.msra.mxu0 0
        %1087 = vmatpush.bf16.msra.mxu0 %v892
        %1088 = vmatmul.bf16.gmra.mxu0 %v994
        %v1089 = vpop.f32.mrf.mxu0
        %v1090 = vadd.f32 %v1076, %v1089
        %v1091 = vpop.f32.mrf.mxu0
        %v1092 = vadd.f32 %v1078, %v1091
        %1093 = vdwg.mxu0
        %1094 = vmatpush.bf16.msra.mxu0 %v811
        %1095 = vmatpush.bf16.msra.mxu0 %v809
        %1096 = vmatpush.bf16.msra.mxu0 %v807
        %1097 = vmatpush.bf16.msra.mxu0 %v805
        %1098 = vmatpush.bf16.msra.mxu0 %v803
        %1099 = vmatpush.bf16.msra.mxu0 %v801
        %1100 = vmatpush.bf16.msra.mxu0 %v799
        %1101 = vmatpush.bf16.msra.mxu0 %v797
        %1102 = vmatmul.bf16.gmra.mxu0 %v489
        %v1103 = vpop.f32.mrf.mxu0
        %v1104 = vadd.f32 %v464, %v1103
        %v1105 = vpop.f32.mrf.mxu0
        %v1106 = vadd.f32 %v464, %v1105
        %1107 = vdwg.mxu0
        %1108 = vmatpush.bf16.msra.mxu0 %v827
        %1109 = vmatpush.bf16.msra.mxu0 %v825
        %1110 = vmatpush.bf16.msra.mxu0 %v823
        %1111 = vmatpush.bf16.msra.mxu0 %v821
        %1112 = vmatpush.bf16.msra.mxu0 %v819
        %1113 = vmatpush.bf16.msra.mxu0 %v817
        %1114 = vmatpush.bf16.msra.mxu0 %v815
        %1115 = vmatpush.bf16.msra.mxu0 %v813
        %1116 = vmatmul.bf16.gmra.mxu0 %v490
        %v1117 = vpop.f32.mrf.mxu0
        %v1118 = vadd.f32 %v1104, %v1117
        %v1119 = vpop.f32.mrf.mxu0
        %v1120 = vadd.f32 %v1106, %v1119
        %1121 = vdwg.mxu0
        %1122 = vmatpush.bf16.msra.mxu0 %v843
        %1123 = vmatpush.bf16.msra.mxu0 %v841
        %1124 = vmatpush.bf16.msra.mxu0 %v839
        %1125 = vmatpush.bf16.msra.mxu0 %v837
        %1126 = vmatpush.bf16.msra.mxu0 %v835
        %1127 = vmatpush.bf16.msra.mxu0 %v833
        %1128 = vmatpush.bf16.msra.mxu0 %v831
        %1129 = vmatpush.bf16.msra.mxu0 %v829
        %1130 = vmatmul.bf16.gmra.mxu0 %v491
        %v1131 = vpop.f32.mrf.mxu0
        %v1132 = vadd.f32 %v1118, %v1131
        %v1133 = vpop.f32.mrf.mxu0
        %v1134 = vadd.f32 %v1120, %v1133
        %1135 = vdwg.mxu0
        %1136 = vmatpush.bf16.msra.mxu0 %v859
        %1137 = vmatpush.bf16.msra.mxu0 %v857
        %1138 = vmatpush.bf16.msra.mxu0 %v855
        %1139 = vmatpush.bf16.msra.mxu0 %v853
        %1140 = vmatpush.bf16.msra.mxu0 %v851
        %1141 = vmatpush.bf16.msra.mxu0 %v849
        %1142 = vmatpush.bf16.msra.mxu0 %v847
        %1143 = vmatpush.bf16.msra.mxu0 %v845
        %1144 = vmatmul.bf16.gmra.mxu0 %v492
        %v1145 = vpop.f32.mrf.mxu0
        %v1146 = vadd.f32 %v1132, %v1145
        %v1147 = vpop.f32.mrf.mxu0
        %v1148 = vadd.f32 %v1134, %v1147
        %1149 = vdwg.mxu0
        %1150 = vmatpush.bf16.msra.mxu0 %v875
        %1151 = vmatpush.bf16.msra.mxu0 %v873
        %1152 = vmatpush.bf16.msra.mxu0 %v871
        %1153 = vmatpush.bf16.msra.mxu0 %v869
        %1154 = vmatpush.bf16.msra.mxu0 %v867
        %1155 = vmatpush.bf16.msra.mxu0 %v865
        %1156 = vmatpush.bf16.msra.mxu0 %v863
        %1157 = vmatpush.bf16.msra.mxu0 %v861
        %1158 = vmatmul.bf16.gmra.mxu0 %v493
        %v1159 = vpop.f32.mrf.mxu0
        %v1160 = vadd.f32 %v1146, %v1159
        %v1161 = vpop.f32.mrf.mxu0
        %v1162 = vadd.f32 %v1148, %v1161
        %1163 = vdwg.mxu0
        %1164 = vmatpush.bf16.msra.mxu0 %v891
        %1165 = vmatpush.bf16.msra.mxu0 %v889
        %1166 = vmatpush.bf16.msra.mxu0 %v887
        %1167 = vmatpush.bf16.msra.mxu0 %v885
        %1168 = vmatpush.bf16.msra.mxu0 %v883
        %1169 = vmatpush.bf16.msra.mxu0 %v881
        %1170 = vmatpush.bf16.msra.mxu0 %v879
        %1171 = vmatpush.bf16.msra.mxu0 %v877
        %1172 = vmatmul.bf16.gmra.mxu0 %v494
        %v1173 = vpop.f32.mrf.mxu0
        %v1174 = vadd.f32 %v1160, %v1173
        %v1175 = vpop.f32.mrf.mxu0
        %v1176 = vadd.f32 %v1162, %v1175
        %1177 = vdwg.mxu0
        %1178 = vmatpush.bf16.msra.mxu0 0
        %1179 = vmatpush.bf16.msra.mxu0 0
        %1180 = vmatpush.bf16.msra.mxu0 0
        %1181 = vmatpush.bf16.msra.mxu0 0
        %1182 = vmatpush.bf16.msra.mxu0 0
        %1183 = vmatpush.bf16.msra.mxu0 0
        %1184 = vmatpush.bf16.msra.mxu0 0
        %1185 = vmatpush.bf16.msra.mxu0 %v893
        %1186 = vmatmul.bf16.gmra.mxu0 %v994
        %v1187 = vpop.f32.mrf.mxu0
        %v1188 = vadd.f32 %v1174, %v1187
        %v1189 = vpop.f32.mrf.mxu0
        %v1190 = vadd.f32 %v1176, %v1189
        %1191 = vdwg.mxu0
        %v1192 = vmax.f32 %v1090, 0.0
        %v1193 = vmax.f32 %v1188, 0.0
        %v1194 = vmax.f32 %v1092, 0.0
        %v1195 = vmax.f32 %v1190, 0.0
        %s1196 = sld [smem:[#allocation3]]
        %s1197 = smul.u32 %s1196, 668265263
        %s1198 = smul.u32 %s28, 374761393
        %s1199 = sadd.s32 %s1197, %s1198
        %s1200 = sadd.s32 %s1199, 3266489917
        %v1201 = vlaneseq
        %v1202 = vshrl.u32 %v1201, 7
        %v1203 = vadd.s32 %v1202, 8
        %v1204 = vlaneseq
        %v1205 = vand.u32 %v1204, 127
        %v1206 = vadd.s32 %v1205, 128
        %v1207 = vmul.u32 %v1202, 2654435761
        %v1208 = vmul.u32 %v1203, 2654435761
        %v1209 = vstv %s1200
        %v1210 = vxor.u32 %v1209, %v1207
        %v1211 = vxor.u32 %v1209, %v1208
        %v1212 = vmul.u32 %v1205, 2246822519
        %v1213 = vmul.u32 %v1206, 2246822519
        %v1214 = vxor.u32 %v1210, %v1212
        %v1215 = vxor.u32 %v1210, %v1213
        %v1216 = vxor.u32 %v1211, %v1212
        %v1217 = vxor.u32 %v1211, %v1213
        %v1218 = vshrl.u32 %v1214, 16
        %v1219 = vshrl.u32 %v1215, 16
        %v1220 = vshrl.u32 %v1216, 16
        %v1221 = vshrl.u32 %v1217, 16
        %v1222 = vxor.u32 %v1214, %v1218
        %v1223 = vxor.u32 %v1215, %v1219
        %v1224 = vxor.u32 %v1216, %v1220
        %v1225 = vxor.u32 %v1217, %v1221
        %v1226 = vmul.u32 %v1222, 2146121005
        %v1227 = vmul.u32 %v1223, 2146121005
        %v1228 = vmul.u32 %v1224, 2146121005
        %v1229 = vmul.u32 %v1225, 2146121005
        %v1230 = vshrl.u32 %v1226, 15
        %v1231 = vshrl.u32 %v1227, 15
        %v1232 = vshrl.u32 %v1228, 15
        %v1233 = vshrl.u32 %v1229, 15
        %v1234 = vxor.u32 %v1226, %v1230
        %v1235 = vxor.u32 %v1227, %v1231
        %v1236 = vxor.u32 %v1228, %v1232
        %v1237 = vxor.u32 %v1229, %v1233
        %v1238 = vmul.u32 %v1234, 2221713035
        %v1239 = vmul.u32 %v1235, 2221713035
        %v1240 = vmul.u32 %v1236, 2221713035
        %v1241 = vmul.u32 %v1237, 2221713035
        %v1242 = vshrl.u32 %v1238, 16
        %v1243 = vshrl.u32 %v1239, 16
        %v1244 = vshrl.u32 %v1240, 16
        %v1245 = vshrl.u32 %v1241, 16
        %v1246 = vxor.u32 %v1238, %v1242
        %v1247 = vxor.u32 %v1239, %v1243
        %v1248 = vxor.u32 %v1240, %v1244
        %v1249 = vxor.u32 %v1241, %v1245
        %v1250 = vadd.s32 %v1246, 2147483648
        %vm1252 = vcmp.ge.s32.totalorder %v1250, 3006477107
        %v1253 = vadd.s32 %v1247, 2147483648
        %vm1255 = vcmp.ge.s32.totalorder %v1253, 3006477107
        %v1256 = vadd.s32 %v1248, 2147483648
        %vm1258 = vcmp.ge.s32.totalorder %v1256, 3006477107
        %v1259 = vadd.s32 %v1249, 2147483648
        %vm1261 = vcmp.ge.s32.totalorder %v1259, 3006477107
        %v1262 = vsel %vm1252, %v1192, 0.0
        %v1263 = vsel %vm1255, %v1193, 0.0
        %v1264 = vsel %vm1258, %v1194, 0.0
        %v1265 = vsel %vm1261, %v1195, 0.0
        %v1266 = vpack.c.bf16 %v1264, %v1262
        %v1267 = vpack.c.bf16 %v1265, %v1263
        %v1268 = vld [vmem:[#allocation9] sm:$0xff]
        %v1269 = vld [vmem:[#allocation9 + $0x8] sm:$0xff]
        %v1270 = vld [vmem:[#allocation9 + $0x10] sm:$0xff]
        %v1271 = vld [vmem:[#allocation9 + $0x18] sm:$0xff]
        %v1272 = vld [vmem:[#allocation9 + $0x20] sm:$0xff]
        %v1273 = vld [vmem:[#allocation9 + $0x28] sm:$0xff]
        %v1274 = vld [vmem:[#allocation9 + $0x30] sm:$0xff]
        %v1275 = vld [vmem:[#allocation9 + $0x38] sm:$0xff]
        %v1276 = vld [vmem:[#allocation9 + $0x40] sm:$0xff]
        %v1277 = vld [vmem:[#allocation9 + $0x48] sm:$0xff]
        %v1278 = vld [vmem:[#allocation9 + $0x50] sm:$0xff]
        %v1279 = vld [vmem:[#allocation9 + $0x58] sm:$0xff]
        %v1280 = vld [vmem:[#allocation9 + $0x60] sm:$0xff]
        %v1281 = vld [vmem:[#allocation9 + $0x68] sm:$0xff]
        %v1282 = vld [vmem:[#allocation9 + $0x70] sm:$0xff]
        %v1283 = vld [vmem:[#allocation9 + $0x78] sm:$0xff]
        %v1284 = vld [vmem:[#allocation9 + $0x80] sm:$0xff]
        %v1285 = vld [vmem:[#allocation9 + $0x88] sm:$0xff]
        %v1286 = vld [vmem:[#allocation9 + $0x90] sm:$0xff]
        %v1287 = vld [vmem:[#allocation9 + $0x98] sm:$0xff]
        %v1288 = vld [vmem:[#allocation9 + $0xa0] sm:$0xff]
        %v1289 = vld [vmem:[#allocation9 + $0xa8] sm:$0xff]
        %v1290 = vld [vmem:[#allocation9 + $0xb0] sm:$0xff]
        %v1291 = vld [vmem:[#allocation9 + $0xb8] sm:$0xff]
        %v1292 = vld [vmem:[#allocation9 + $0xc0] sm:$0xff]
        %v1293 = vld [vmem:[#allocation9 + $0xc8] sm:$0xff]
        %v1294 = vld [vmem:[#allocation9 + $0xd0] sm:$0xff]
        %v1295 = vld [vmem:[#allocation9 + $0xd8] sm:$0xff]
        %v1296 = vld [vmem:[#allocation9 + $0xe0] sm:$0xff]
        %v1297 = vld [vmem:[#allocation9 + $0xe8] sm:$0xff]
        %v1298 = vld [vmem:[#allocation9 + $0xf0] sm:$0xff]
        %v1299 = vld [vmem:[#allocation9 + $0xf8] sm:$0xff]
        %v1300 = vld [vmem:[%s5] sm:$0x3]
        %v1302 = vperm.slane %v1300, 0
        %v1303 = vperm.slane %v1300, 1
        %v1338 = vunpack.c.l.b16 %v1268
        %v1339 = vunpack.c.h.b16 %v1268
        %v1340 = vunpack.c.l.b16 %v1269
        %v1341 = vunpack.c.h.b16 %v1269
        %v1342 = vunpack.c.l.b16 %v1270
        %v1343 = vunpack.c.h.b16 %v1270
        %v1344 = vunpack.c.l.b16 %v1271
        %v1345 = vunpack.c.h.b16 %v1271
        %v1346 = vunpack.c.l.b16 %v1272
        %v1347 = vunpack.c.h.b16 %v1272
        %v1348 = vunpack.c.l.b16 %v1273
        %v1349 = vunpack.c.h.b16 %v1273
        %v1350 = vunpack.c.l.b16 %v1274
        %v1351 = vunpack.c.h.b16 %v1274
        %v1352 = vunpack.c.l.b16 %v1275
        %v1353 = vunpack.c.h.b16 %v1275
        %v1354 = vunpack.c.l.b16 %v1276
        %v1355 = vunpack.c.h.b16 %v1276
        %v1356 = vunpack.c.l.b16 %v1277
        %v1357 = vunpack.c.h.b16 %v1277
        %v1358 = vunpack.c.l.b16 %v1278
        %v1359 = vunpack.c.h.b16 %v1278
        %v1360 = vunpack.c.l.b16 %v1279
        %v1361 = vunpack.c.h.b16 %v1279
        %v1362 = vunpack.c.l.b16 %v1280
        %v1363 = vunpack.c.h.b16 %v1280
        %v1364 = vunpack.c.l.b16 %v1281
        %v1365 = vunpack.c.h.b16 %v1281
        %v1366 = vunpack.c.l.b16 %v1282
        %v1367 = vunpack.c.h.b16 %v1282
        %v1368 = vunpack.c.l.b16 %v1283
        %v1369 = vunpack.c.h.b16 %v1283
        %v1370 = vunpack.c.l.b16 %v1284
        %v1371 = vunpack.c.h.b16 %v1284
        %v1372 = vunpack.c.l.b16 %v1285
        %v1373 = vunpack.c.h.b16 %v1285
        %v1374 = vunpack.c.l.b16 %v1286
        %v1375 = vunpack.c.h.b16 %v1286
        %v1376 = vunpack.c.l.b16 %v1287
        %v1377 = vunpack.c.h.b16 %v1287
        %v1378 = vunpack.c.l.b16 %v1288
        %v1379 = vunpack.c.h.b16 %v1288
        %v1380 = vunpack.c.l.b16 %v1289
        %v1381 = vunpack.c.h.b16 %v1289
        %v1382 = vunpack.c.l.b16 %v1290
        %v1383 = vunpack.c.h.b16 %v1290
        %v1384 = vunpack.c.l.b16 %v1291
        %v1385 = vunpack.c.h.b16 %v1291
        %v1386 = vunpack.c.l.b16 %v1292
        %v1387 = vunpack.c.h.b16 %v1292
        %v1388 = vunpack.c.l.b16 %v1293
        %v1389 = vunpack.c.h.b16 %v1293
        %v1390 = vunpack.c.l.b16 %v1294
        %v1391 = vunpack.c.h.b16 %v1294
        %v1392 = vunpack.c.l.b16 %v1295
        %v1393 = vunpack.c.h.b16 %v1295
        %v1394 = vunpack.c.l.b16 %v1296
        %v1395 = vunpack.c.h.b16 %v1296
        %v1396 = vunpack.c.l.b16 %v1297
        %v1397 = vunpack.c.h.b16 %v1297
        %v1398 = vunpack.c.l.b16 %v1298
        %v1399 = vunpack.c.h.b16 %v1298
        %v1400 = vunpack.c.l.b16 %v1299
        %v1401 = vunpack.c.h.b16 %v1299
        %v1402 = vpack.c.b16 %v1340, %v1338
        %v1403 = vpack.c.b16 %v1341, %v1339
        %v1404 = vpack.c.b16 %v1344, %v1342
        %v1405 = vpack.c.b16 %v1345, %v1343
        %v1406 = vpack.c.b16 %v1348, %v1346
        %v1407 = vpack.c.b16 %v1349, %v1347
        %v1408 = vpack.c.b16 %v1352, %v1350
        %v1409 = vpack.c.b16 %v1353, %v1351
        %v1410 = vpack.c.b16 %v1356, %v1354
        %v1411 = vpack.c.b16 %v1357, %v1355
        %v1412 = vpack.c.b16 %v1360, %v1358
        %v1413 = vpack.c.b16 %v1361, %v1359
        %v1414 = vpack.c.b16 %v1364, %v1362
        %v1415 = vpack.c.b16 %v1365, %v1363
        %v1416 = vpack.c.b16 %v1368, %v1366
        %v1417 = vpack.c.b16 %v1369, %v1367
        %v1418 = vpack.c.b16 %v1372, %v1370
        %v1419 = vpack.c.b16 %v1373, %v1371
        %v1420 = vpack.c.b16 %v1376, %v1374
        %v1421 = vpack.c.b16 %v1377, %v1375
        %v1422 = vpack.c.b16 %v1380, %v1378
        %v1423 = vpack.c.b16 %v1381, %v1379
        %v1424 = vpack.c.b16 %v1384, %v1382
        %v1425 = vpack.c.b16 %v1385, %v1383
        %v1426 = vpack.c.b16 %v1388, %v1386
        %v1427 = vpack.c.b16 %v1389, %v1387
        %v1428 = vpack.c.b16 %v1392, %v1390
        %v1429 = vpack.c.b16 %v1393, %v1391
        %v1430 = vpack.c.b16 %v1396, %v1394
        %v1431 = vpack.c.b16 %v1397, %v1395
        %v1432 = vpack.c.b16 %v1400, %v1398
        %v1433 = vpack.c.b16 %v1401, %v1399
        %1466 = vmatpush.bf16.msra.mxu0 %v1416
        %1467 = vmatpush.bf16.msra.mxu0 %v1414
        %1468 = vmatpush.bf16.msra.mxu0 %v1412
        %1469 = vmatpush.bf16.msra.mxu0 %v1410
        %1470 = vmatpush.bf16.msra.mxu0 %v1408
        %1471 = vmatpush.bf16.msra.mxu0 %v1406
        %1472 = vmatpush.bf16.msra.mxu0 %v1404
        %1473 = vmatpush.bf16.msra.mxu0 %v1402
        %1474 = vmatmul.bf16.gmra.mxu0 %v1266
        %v1475 = vpop.f32.mrf.mxu0
        %v1476 = vadd.f32 %v1302, %v1475
        %v1477 = vpop.f32.mrf.mxu0
        %v1478 = vadd.f32 %v1302, %v1477
        %1479 = vdwg.mxu0
        %1480 = vmatpush.bf16.msra.mxu0 %v1432
        %1481 = vmatpush.bf16.msra.mxu0 %v1430
        %1482 = vmatpush.bf16.msra.mxu0 %v1428
        %1483 = vmatpush.bf16.msra.mxu0 %v1426
        %1484 = vmatpush.bf16.msra.mxu0 %v1424
        %1485 = vmatpush.bf16.msra.mxu0 %v1422
        %1486 = vmatpush.bf16.msra.mxu0 %v1420
        %1487 = vmatpush.bf16.msra.mxu0 %v1418
        %1488 = vmatmul.bf16.gmra.mxu0 %v1267
        %v1489 = vpop.f32.mrf.mxu0
        %v1490 = vadd.f32 %v1476, %v1489
        %v1491 = vpop.f32.mrf.mxu0
        %v1492 = vadd.f32 %v1478, %v1491
        %1493 = vdwg.mxu0
        %1494 = vmatpush.bf16.msra.mxu0 %v1417
        %1495 = vmatpush.bf16.msra.mxu0 %v1415
        %1496 = vmatpush.bf16.msra.mxu0 %v1413
        %1497 = vmatpush.bf16.msra.mxu0 %v1411
        %1498 = vmatpush.bf16.msra.mxu0 %v1409
        %1499 = vmatpush.bf16.msra.mxu0 %v1407
        %1500 = vmatpush.bf16.msra.mxu0 %v1405
        %1501 = vmatpush.bf16.msra.mxu0 %v1403
        %1502 = vmatmul.bf16.gmra.mxu0 %v1266
        %v1503 = vpop.f32.mrf.mxu0
        %v1504 = vadd.f32 %v1303, %v1503
        %v1505 = vpop.f32.mrf.mxu0
        %v1506 = vadd.f32 %v1303, %v1505
        %1507 = vdwg.mxu0
        %1508 = vmatpush.bf16.msra.mxu0 %v1433
        %1509 = vmatpush.bf16.msra.mxu0 %v1431
        %1510 = vmatpush.bf16.msra.mxu0 %v1429
        %1511 = vmatpush.bf16.msra.mxu0 %v1427
        %1512 = vmatpush.bf16.msra.mxu0 %v1425
        %1513 = vmatpush.bf16.msra.mxu0 %v1423
        %1514 = vmatpush.bf16.msra.mxu0 %v1421
        %1515 = vmatpush.bf16.msra.mxu0 %v1419
        %1516 = vmatmul.bf16.gmra.mxu0 %v1267
        %v1517 = vpop.f32.mrf.mxu0
        %v1518 = vadd.f32 %v1504, %v1517
        %v1519 = vpop.f32.mrf.mxu0
        %v1520 = vadd.f32 %v1506, %v1519
        %1521 = vdwg.mxu0
        %v1522 = vmax.f32 %v1490, 0.0
        %v1523 = vmax.f32 %v1518, 0.0
        %v1524 = vmax.f32 %v1492, 0.0
        %v1525 = vmax.f32 %v1520, 0.0
        %s1526 = sadd.s32 %s1199, 2238012538
        %v1527 = vstv %s1526
        %v1528 = vxor.u32 %v1527, %v1207
        %v1529 = vxor.u32 %v1527, %v1208
        %v1530 = vxor.u32 %v1528, %v1212
        %v1531 = vxor.u32 %v1528, %v1213
        %v1532 = vxor.u32 %v1529, %v1212
        %v1533 = vxor.u32 %v1529, %v1213
        %v1534 = vshrl.u32 %v1530, 16
        %v1535 = vshrl.u32 %v1531, 16
        %v1536 = vshrl.u32 %v1532, 16
        %v1537 = vshrl.u32 %v1533, 16
        %v1538 = vxor.u32 %v1530, %v1534
        %v1539 = vxor.u32 %v1531, %v1535
        %v1540 = vxor.u32 %v1532, %v1536
        %v1541 = vxor.u32 %v1533, %v1537
        %v1542 = vmul.u32 %v1538, 2146121005
        %v1543 = vmul.u32 %v1539, 2146121005
        %v1544 = vmul.u32 %v1540, 2146121005
        %v1545 = vmul.u32 %v1541, 2146121005
        %v1546 = vshrl.u32 %v1542, 15
        %v1547 = vshrl.u32 %v1543, 15
        %v1548 = vshrl.u32 %v1544, 15
        %v1549 = vshrl.u32 %v1545, 15
        %v1550 = vxor.u32 %v1542, %v1546
        %v1551 = vxor.u32 %v1543, %v1547
        %v1552 = vxor.u32 %v1544, %v1548
        %v1553 = vxor.u32 %v1545, %v1549
        %v1554 = vmul.u32 %v1550, 2221713035
        %v1555 = vmul.u32 %v1551, 2221713035
        %v1556 = vmul.u32 %v1552, 2221713035
        %v1557 = vmul.u32 %v1553, 2221713035
        %v1558 = vshrl.u32 %v1554, 16
        %v1559 = vshrl.u32 %v1555, 16
        %v1560 = vshrl.u32 %v1556, 16
        %v1561 = vshrl.u32 %v1557, 16
        %v1562 = vxor.u32 %v1554, %v1558
        %v1563 = vxor.u32 %v1555, %v1559
        %v1564 = vxor.u32 %v1556, %v1560
        %v1565 = vxor.u32 %v1557, %v1561
        %v1566 = vadd.s32 %v1562, 2147483648
        %vm1568 = vcmp.ge.s32.totalorder %v1566, 0
        %v1569 = vadd.s32 %v1563, 2147483648
        %vm1571 = vcmp.ge.s32.totalorder %v1569, 0
        %v1572 = vadd.s32 %v1564, 2147483648
        %vm1574 = vcmp.ge.s32.totalorder %v1572, 0
        %v1575 = vadd.s32 %v1565, 2147483648
        %vm1577 = vcmp.ge.s32.totalorder %v1575, 0
        %v1578 = vsel %vm1568, %v1522, 0.0
        %v1579 = vsel %vm1571, %v1523, 0.0
        %v1580 = vsel %vm1574, %v1524, 0.0
        %v1581 = vsel %vm1577, %v1525, 0.0
        %v1582 = vpack.c.bf16 %v1580, %v1578
        %v1583 = vpack.c.bf16 %v1581, %v1579
        %v1584 = vld [vmem:[#allocation10] sm:$0xf]
        %v1585 = vld [vmem:[#allocation10 + $0x4] sm:$0xf]
        %v1586 = vld [vmem:[#allocation10 + $0x8] sm:$0xf]
        %v1587 = vld [vmem:[#allocation10 + $0xc] sm:$0xf]
        %v1588 = vld [vmem:[#allocation10 + $0x10] sm:$0xf]
        %v1589 = vld [vmem:[#allocation10 + $0x14] sm:$0xf]
        %v1590 = vld [vmem:[#allocation10 + $0x18] sm:$0xf]
        %v1591 = vld [vmem:[#allocation10 + $0x1c] sm:$0xf]
        %v1592 = vld [vmem:[#allocation10 + $0x20] sm:$0xf]
        %v1593 = vld [vmem:[#allocation10 + $0x24] sm:$0xf]
        %v1594 = vld [vmem:[#allocation10 + $0x28] sm:$0xf]
        %v1595 = vld [vmem:[#allocation10 + $0x2c] sm:$0xf]
        %v1596 = vld [vmem:[#allocation10 + $0x30] sm:$0xf]
        %v1597 = vld [vmem:[#allocation10 + $0x34] sm:$0xf]
        %v1598 = vld [vmem:[#allocation10 + $0x38] sm:$0xf]
        %v1599 = vld [vmem:[#allocation10 + $0x3c] sm:$0xf]
        %v1600 = vld [vmem:[#allocation10 + $0x40] sm:$0xf]
        %v1601 = vld [vmem:[#allocation10 + $0x44] sm:$0xf]
        %v1602 = vld [vmem:[#allocation10 + $0x48] sm:$0xf]
        %v1603 = vld [vmem:[#allocation10 + $0x4c] sm:$0xf]
        %v1604 = vld [vmem:[#allocation10 + $0x50] sm:$0xf]
        %v1605 = vld [vmem:[#allocation10 + $0x54] sm:$0xf]
        %v1606 = vld [vmem:[#allocation10 + $0x58] sm:$0xf]
        %v1607 = vld [vmem:[#allocation10 + $0x5c] sm:$0xf]
        %v1608 = vld [vmem:[#allocation10 + $0x60] sm:$0xf]
        %v1609 = vld [vmem:[#allocation10 + $0x64] sm:$0xf]
        %v1610 = vld [vmem:[#allocation10 + $0x68] sm:$0xf]
        %v1611 = vld [vmem:[#allocation10 + $0x6c] sm:$0xf]
        %v1612 = vld [vmem:[#allocation10 + $0x70] sm:$0xf]
        %v1613 = vld [vmem:[#allocation10 + $0x74] sm:$0xf]
        %v1614 = vld [vmem:[#allocation10 + $0x78] sm:$0xf]
        %v1615 = vld [vmem:[#allocation10 + $0x7c] sm:$0xf]
        %v1616 = vld [vmem:[%s7] sm:$0x1]
        %v1618 = vperm.slane %v1616, 0
        %v1652 = vunpack.c.l.b16 %v1584
        %v1653 = vunpack.c.l.b16 %v1585
        %v1654 = vunpack.c.l.b16 %v1586
        %v1655 = vunpack.c.l.b16 %v1587
        %v1656 = vunpack.c.l.b16 %v1588
        %v1657 = vunpack.c.l.b16 %v1589
        %v1658 = vunpack.c.l.b16 %v1590
        %v1659 = vunpack.c.l.b16 %v1591
        %v1660 = vunpack.c.l.b16 %v1592
        %v1661 = vunpack.c.l.b16 %v1593
        %v1662 = vunpack.c.l.b16 %v1594
        %v1663 = vunpack.c.l.b16 %v1595
        %v1664 = vunpack.c.l.b16 %v1596
        %v1665 = vunpack.c.l.b16 %v1597
        %v1666 = vunpack.c.l.b16 %v1598
        %v1667 = vunpack.c.l.b16 %v1599
        %v1668 = vunpack.c.l.b16 %v1600
        %v1669 = vunpack.c.l.b16 %v1601
        %v1670 = vunpack.c.l.b16 %v1602
        %v1671 = vunpack.c.l.b16 %v1603
        %v1672 = vunpack.c.l.b16 %v1604
        %v1673 = vunpack.c.l.b16 %v1605
        %v1674 = vunpack.c.l.b16 %v1606
        %v1675 = vunpack.c.l.b16 %v1607
        %v1676 = vunpack.c.l.b16 %v1608
        %v1677 = vunpack.c.l.b16 %v1609
        %v1678 = vunpack.c.l.b16 %v1610
        %v1679 = vunpack.c.l.b16 %v1611
        %v1680 = vunpack.c.l.b16 %v1612
        %v1681 = vunpack.c.l.b16 %v1613
        %v1682 = vunpack.c.l.b16 %v1614
        %v1683 = vunpack.c.l.b16 %v1615
        %v1684 = vpack.c.b16 %v1653, %v1652
        %v1685 = vpack.c.b16 %v1655, %v1654
        %v1686 = vpack.c.b16 %v1657, %v1656
        %v1687 = vpack.c.b16 %v1659, %v1658
        %v1688 = vpack.c.b16 %v1661, %v1660
        %v1689 = vpack.c.b16 %v1663, %v1662
        %v1690 = vpack.c.b16 %v1665, %v1664
        %v1691 = vpack.c.b16 %v1667, %v1666
        %v1692 = vpack.c.b16 %v1669, %v1668
        %v1693 = vpack.c.b16 %v1671, %v1670
        %v1694 = vpack.c.b16 %v1673, %v1672
        %v1695 = vpack.c.b16 %v1675, %v1674
        %v1696 = vpack.c.b16 %v1677, %v1676
        %v1697 = vpack.c.b16 %v1679, %v1678
        %v1698 = vpack.c.b16 %v1681, %v1680
        %v1699 = vpack.c.b16 %v1683, %v1682
        %1716 = vmatpush.bf16.msra.mxu0 %v1691
        %1717 = vmatpush.bf16.msra.mxu0 %v1690
        %1718 = vmatpush.bf16.msra.mxu0 %v1689
        %1719 = vmatpush.bf16.msra.mxu0 %v1688
        %1720 = vmatpush.bf16.msra.mxu0 %v1687
        %1721 = vmatpush.bf16.msra.mxu0 %v1686
        %1722 = vmatpush.bf16.msra.mxu0 %v1685
        %1723 = vmatpush.bf16.msra.mxu0 %v1684
        %1724 = vmatmul.bf16.gmra.mxu0 %v1582
        %v1725 = vpop.f32.mrf.mxu0
        %v1726 = vadd.f32 %v1618, %v1725
        %v1727 = vpop.f32.mrf.mxu0
        %v1728 = vadd.f32 %v1618, %v1727
        %1729 = vdwg.mxu0
        %1730 = vmatpush.bf16.msra.mxu0 %v1699
        %1731 = vmatpush.bf16.msra.mxu0 %v1698
        %1732 = vmatpush.bf16.msra.mxu0 %v1697
        %1733 = vmatpush.bf16.msra.mxu0 %v1696
        %1734 = vmatpush.bf16.msra.mxu0 %v1695
        %1735 = vmatpush.bf16.msra.mxu0 %v1694
        %1736 = vmatpush.bf16.msra.mxu0 %v1693
        %1737 = vmatpush.bf16.msra.mxu0 %v1692
        %1738 = vmatmul.bf16.gmra.mxu0 %v1583
        %v1739 = vpop.f32.mrf.mxu0
        %v1740 = vadd.f32 %v1726, %v1739
        %v1741 = vpop.f32.mrf.mxu0
        %v1742 = vadd.f32 %v1728, %v1741
        %1743 = vdwg.mxu0
        %1744 = vst [vmem:[%s351] sm:$0xff] %v1740
        %1745 = vst [vmem:[%s351 + $0x8] sm:$0xff] %v1742
        %s1746 = sand.u32 %s188, 1
        %s1747 = scalar_lea.sflag [#allocation6], %s1746
        %s1748 = sand.u32 %s188, 1
        %s1749 = smul.addr %s1748, 16
        %s1750 = scalar_lea.vmem [#allocation12], %s1749
        // Predicated region
        $region65: #{tpu_custom_call.1} parent=47 // pred_check
          %p1751 = pneg %p198
        $region66: #{tpu_custom_call.1} parent=47 // pred_check_branch
          %1753 = sbr.rel (%p1751) target = $region68
        $region67: #{tpu_custom_call.1} parent=47 // pred_region
          %s1754 = smul.u32 2, %s28
          %1756 = vsyncadd %s1747, 0
          %s1757 = smul.addr %s1754, 8
          %s1758 = scalar_lea.hbm %s8, %s1757
          %s1759 = sshll.u32 %s1750, 4
          %s1760 = int_to_ptr.vmem [resolvable:$true] %s1759
          %s1761 = sshll.u32 %s1758, 4
          %s1762 = int_to_ptr.hbm [resolvable:$true] %s1761
          %1767 = dma.vmem_to_hbm [thread:$0]  %s1760, 256, %s1762, %s1747, 128, 128, 8
        $region68: #{tpu_custom_call.1} parent=47 // pred_fallthru
          _
      $region48: #{tpu_custom_call.1} parent=5 // pred_fallthru
        _
      %p1768 = scmp.le.s32.totalorder 2, %s23
      // Predicated region
      $region69: #{tpu_custom_call.1} parent=5 // pred_check
        %p1769 = pneg %p1768
      $region70: #{tpu_custom_call.1} parent=5 // pred_check_branch
        %1771 = sbr.rel (%p1769) target = $region72
      $region71: #{tpu_custom_call.1} parent=5 // pred_region
        %s1772 = ssub.s32 %s23, 2
        // Predicated region
        $region73: #{tpu_custom_call.1} parent=71 // pred_check
          %p1773 = pneg %p204
        $region74: #{tpu_custom_call.1} parent=71 // pred_check_branch
          %1775 = sbr.rel (%p1773) target = $region76
        $region75: #{tpu_custom_call.1} parent=71 // pred_region
          %s1776 = sand.u32 %s189, 1
          %s1777 = scalar_lea.sflag [#allocation6], %s1776
          %s1778 = sand.u32 %s189, 1
          %s1779 = smul.addr %s1778, 16
          %s1780 = scalar_lea.vmem [#allocation12], %s1779
          %1782 = dma.done %s1777, 256
        $region76: #{tpu_custom_call.1} parent=71 // pred_fallthru
          _
      $region72: #{tpu_custom_call.1} parent=5 // pred_fallthru
        _
    $region6: #{tpu_custom_call.1} parent=1 // loop_footer
      %s27 = sadd.s32 1, %s23
    $region7: #{tpu_custom_call.1} parent=1 // loop_footer_branch
      %22 = sbr.rel target = $region3
    $region8: #{tpu_custom_call.1} parent=1 // loop_exit
      _
    %1783 = vsyncpa [#allocation5], 1
    %s1784 = scalar_lea.sflag [#allocation5], 1
    %1785 = vsyncpa %s1784, 1
    %1786 = vsyncpa [#allocation8], 1
    %1787 = vsyncpa [#allocation11], 1
    %1788 = vsyncpa [#allocation6], 1
    %s1789 = scalar_lea.sflag [#allocation6], 1
    %1790 = vsyncpa %s1789, 1

</llo_original>
